<compile_context>
chip_gen: v5e
topology: v5e:2x2
jax: 0.10.0
libtpu: 0.0.40
codegen_flags: <defaults>
</compile_context>

<pallas_src>
import jax
import jax.numpy as jnp
from jax.experimental import pallas as pl
from jax.experimental.pallas import tpu as pltpu

META_SIZE = 4
NUM_UNITS_ECONOMICAL = 16
NUM_UNITS = 50
STARTING_UNIT_TENSOR_SIZE = NUM_UNITS_ECONOMICAL * 3   # 48
TARGET_UNIT_TENSOR_SIZE = NUM_UNITS * 3                # 150

N = 50
M1 = N * 4   # 200
M3 = N * 2   # 100
M4 = N       # 50
M2 = 10

LEAKY_SLOPE = 0.01
BN_EPS = 1e-5

# Linear layer sizes, forward order.  0: fc1_1, 1: fc1_2, 2..11: seq Linears.
LINEAR_DIMS = [
    (STARTING_UNIT_TENSOR_SIZE, M1),   # 0: fc1_1   48  -> 200
    (TARGET_UNIT_TENSOR_SIZE, M1),     # 1: fc1_2   150 -> 200
    (M1 * 2 + META_SIZE, M3),          # 2: seq L0  404 -> 100
    (M3, M4),                          # 3: seq L1  100 -> 50
    (M4, M2),                          # 4: seq L2  50  -> 10
    (M2, M2),                          # 5
    (M2, M2),                          # 6
    (M2, M2),                          # 7
    (M2, M2),                          # 8
    (M2, 5),                           # 9
    (5, 5),                            # 10
    (5, 3),                            # 11
]
BN_DIMS = [M3, M4, M2, M2, M2, M2]
NUM_LINEAR = len(LINEAR_DIMS)
NUM_BN = len(BN_DIMS)

# BN index -> index of the Linear that *consumes* its output (fold target).
BN_TO_LINEAR = {0: 3, 1: 4, 2: 5, 3: 7, 4: 8, 5: 9}

# ---------------- packed parameter slab layout (bf16, 16-aligned rows) -------
LANE_WIDE = 256      # lane width holding the 200-wide fc1 outputs
LANE_NARROW = 128    # lane width holding everything <= 100 wide

A_MERGED = 64        # a (48 lanes) + meta (lanes 48:52), padded to 64
B_PAD = 160          # 150 rounded up to a multiple of 16

# Wide slab (LANE_WIDE lanes)
R_W0 = 0                     # fc1_1 weight, 64 rows (rows 48:64 zero)
R_W1 = R_W0 + A_MERGED       # fc1_2 weight, 160 rows (150 used)
R_BW = R_W1 + B_PAD          # bias block, 16 rows (row0=b_fc1_1, row1=b_fc1_2)
WIDE_ROWS = R_BW + 16        # 240

# Narrow slab (LANE_NARROW lanes)
R_W2A = 0                                    # seq L0, a1 rows (256 rows, 200 used)
R_W2B = R_W2A + LANE_WIDE                    # seq L0, b1 rows (256 rows, 200 used)
R_W2M = R_W2B + LANE_WIDE                    # seq L0, meta rows (64 rows, rows 48:52 live)
R_NARROW0 = R_W2M + A_MERGED                 # 9 x 128-row blocks (linears 3..11)
NUM_NARROW = 9
R_BN = R_NARROW0 + NUM_NARROW * LANE_NARROW  # bias block, 16 rows (rows 0..9 used)
NARROW_ROWS = R_BN + 16                      # 1744

BATCH_TILE = 1024
ROW_ALIGN = 16       # bf16 sublane packing


def _round_up(x, m):
    return (x + m - 1) // m * m


def _leaky_relu(x):
    return jnp.where(x >= 0, x, LEAKY_SLOPE * x)


# ------------------------------- kernel -------------------------------------
def net_kernel(a_ref, b_ref, wide_ref, narrow_ref, out_ref):
    """Whole (BN-folded) forward pass on one batch tile, fully VMEM-resident."""
    f32 = jnp.float32
    bf16 = jnp.bfloat16

    def dot(x, w):
        # bf16 operands, f32 accumulation on the MXU.
        return jnp.dot(x, w, preferred_element_type=f32)

    bias_w = wide_ref[R_BW:R_BW + 16, :].astype(f32)      # row0=b_fc1_1, row1=b_fc1_2
    bias_n = narrow_ref[R_BN:R_BN + 16, :].astype(f32)    # row0=b_L2, rows1..9=b_L3..L11

    a = a_ref[...]                   # (TB, 64) bf16: a in lanes 0:48, meta in 48:52
    b = b_ref[...]                   # (TB, 160) bf16 (cols 150.. are zero)

    # fc1_1 / fc1_2 -> 256-lane f32 activations (cols >= 200 are zero).
    a1 = _leaky_relu(dot(a, wide_ref[R_W0:R_W0 + A_MERGED, :]) + bias_w[0:1, :])
    b1 = _leaky_relu(dot(b, wide_ref[R_W1:R_W1 + B_PAD, :]) + bias_w[1:2, :])

    # seq Linear 0 with the concat replaced by a split-weight accumulation.
    h = dot(a1.astype(bf16), narrow_ref[R_W2A:R_W2A + LANE_WIDE, :])
    h = h + dot(b1.astype(bf16), narrow_ref[R_W2B:R_W2B + LANE_WIDE, :])
    h = h + dot(a, narrow_ref[R_W2M:R_W2M + A_MERGED, :])   # meta contribution
    h = _leaky_relu(h + bias_n[0:1, :])                      # (TB,128), cols>=100 zero

    # seq Linears 1..9 (BN already folded into the weights/biases).
    for j in range(NUM_NARROW):
        r = R_NARROW0 + j * LANE_NARROW
        h = _leaky_relu(dot(h.astype(bf16), narrow_ref[r:r + LANE_NARROW, :])
                        + bias_n[1 + j:2 + j, :])

    out_ref[...] = h.astype(out_ref.dtype)                   # lane-dense bf16 store


# --------------------------- parameter handling ------------------------------
def init_params(key):
    """PyTorch-style Linear init + non-trivial BN running stats (eval mode)."""
    keys = jax.random.split(key, NUM_LINEAR * 2 + NUM_BN * 4)
    lin = []
    for i, (fin, fout) in enumerate(LINEAR_DIMS):
        bound = 1.0 / float(fin) ** 0.5
        w = jax.random.uniform(keys[2 * i], (fin, fout), jnp.float32, -bound, bound)
        bvec = jax.random.uniform(keys[2 * i + 1], (fout,), jnp.float32, -bound, bound)
        lin.append((w, bvec))
    bn = []
    base = NUM_LINEAR * 2
    for i, f in enumerate(BN_DIMS):
        k0, k1, k2, k3 = keys[base + 4 * i: base + 4 * i + 4]
        gamma = jax.random.uniform(k0, (f,), jnp.float32, 0.5, 1.5)
        beta = 0.1 * jax.random.normal(k1, (f,), jnp.float32)
        mean = 0.1 * jax.random.normal(k2, (f,), jnp.float32)
        var = jax.random.uniform(k3, (f,), jnp.float32, 0.5, 1.5)
        bn.append((gamma, beta, mean, var))
    return lin, bn


def fold_and_pack(lin, bn):
    """Fold inference BN into the following Linear; pack into two bf16 slabs."""
    folded = [list(p) for p in lin]
    for bi, li in BN_TO_LINEAR.items():
        g, be, mu, var = bn[bi]
        s = g * jax.lax.rsqrt(var + BN_EPS)
        t = be - mu * s
        w, bvec = folded[li]
        folded[li] = [w * s[:, None], bvec + t @ w]

    # Split seq Linear 0 (404 -> 100) into a1 / b1 / meta blocks.
    w2, b2 = folded[2]
    w2a, w2b, w2m = w2[:M1], w2[M1:2 * M1], w2[2 * M1:]

    wide = jnp.zeros((WIDE_ROWS, LANE_WIDE), jnp.float32)
    w0, b0 = folded[0]
    w1, b1v = folded[1]
    wide = wide.at[R_W0:R_W0 + w0.shape[0], :w0.shape[1]].set(w0)   # meta rows stay 0
    wide = wide.at[R_W1:R_W1 + w1.shape[0], :w1.shape[1]].set(w1)
    wide = wide.at[R_BW, :b0.shape[0]].set(b0)
    wide = wide.at[R_BW + 1, :b1v.shape[0]].set(b1v)

    narrow = jnp.zeros((NARROW_ROWS, LANE_NARROW), jnp.float32)
    narrow = narrow.at[R_W2A:R_W2A + w2a.shape[0], :w2a.shape[1]].set(w2a)
    narrow = narrow.at[R_W2B:R_W2B + w2b.shape[0], :w2b.shape[1]].set(w2b)
    # meta rows of seq L0 live at rows 48:52 so the merged (a|meta) input can
    # reuse this 64-row block directly.
    narrow = narrow.at[R_W2M + STARTING_UNIT_TENSOR_SIZE:
                       R_W2M + STARTING_UNIT_TENSOR_SIZE + META_SIZE,
                       :w2m.shape[1]].set(w2m)
    narrow = narrow.at[R_BN, :b2.shape[0]].set(b2)
    for j in range(NUM_NARROW):                 # linears 3..11
        w, bvec = folded[3 + j]
        r = R_NARROW0 + j * LANE_NARROW
        narrow = narrow.at[r:r + w.shape[0], :w.shape[1]].set(w)
        narrow = narrow.at[R_BN + 1 + j, :bvec.shape[0]].set(bvec)
    return wide.astype(jnp.bfloat16), narrow.astype(jnp.bfloat16)


# ------------------------------- wrapper -------------------------------------
@jax.jit
def net_forward(a, b, meta, wide_slab, narrow_slab):
    batch = a.shape[0]
    pb0 = _round_up(batch, ROW_ALIGN)
    # Tile up to BATCH_TILE rows, but keep >= 2 grid steps when the batch
    # allows (so v7x's two TensorCores both get work via "parallel").
    n_steps = max(1 if pb0 <= ROW_ALIGN else 2, pl.cdiv(pb0, BATCH_TILE))
    tb = _round_up(pl.cdiv(pb0, n_steps), ROW_ALIGN)
    pb = _round_up(pb0, tb)

    bf16 = jnp.bfloat16
    # Fused pad + bf16 cast; meta merged into the `a` input (lanes 48:52).
    a_p = jnp.zeros((pb, A_MERGED), bf16)
    a_p = a_p.at[:batch, :STARTING_UNIT_TENSOR_SIZE].set(a.astype(bf16))
    a_p = a_p.at[:batch,
                 STARTING_UNIT_TENSOR_SIZE:STARTING_UNIT_TENSOR_SIZE + META_SIZE
                 ].set(meta.astype(bf16))
    b_p = jnp.zeros((pb, B_PAD), bf16).at[
        :batch, :TARGET_UNIT_TENSOR_SIZE].set(b.astype(bf16))

    out = pl.pallas_call(
        net_kernel,
        out_shape=jax.ShapeDtypeStruct((pb, LANE_NARROW), bf16),
        grid=(pb // tb,),
        in_specs=[
            pl.BlockSpec((tb, A_MERGED), lambda i: (i, 0)),
            pl.BlockSpec((tb, B_PAD), lambda i: (i, 0)),
            pl.BlockSpec((WIDE_ROWS, LANE_WIDE), lambda i: (0, 0)),      # resident
            pl.BlockSpec((NARROW_ROWS, LANE_NARROW), lambda i: (0, 0)),  # resident
        ],
        out_specs=pl.BlockSpec((tb, LANE_NARROW), lambda i: (i, 0)),
        compiler_params=pltpu.CompilerParams(
            dimension_semantics=("parallel",),
            vmem_limit_bytes=48 * 1024 * 1024,
        ),
    )(a_p, b_p, wide_slab, narrow_slab)
    return out[:batch, :3].astype(jnp.float32)


# ----------------------------- pure-JAX reference ----------------------------
def net_forward_ref(a, b, meta, lin, bn):
    """Unfused f32 reference matching the original PyTorch module in eval mode."""
    def L(x, i):
        w, bvec = lin[i]
        return x @ w + bvec

    def B(x, i):
        g, be, mu, var = bn[i]
        return (x - mu) * (g / jnp.sqrt(var + BN_EPS)) + be

    a1 = _leaky_relu(L(a, 0))
    b1 = _leaky_relu(L(b, 1))
    c = jnp.concatenate([a1, b1, meta], axis=1)
    c = B(_leaky_relu(L(c, 2)), 0)
    c = B(_leaky_relu(L(c, 3)), 1)
    c = B(_leaky_relu(L(c, 4)), 2)
    c = _leaky_relu(L(c, 5))
    c = B(_leaky_relu(L(c, 6)), 3)
    c = B(_leaky_relu(L(c, 7)), 4)
    c = B(_leaky_relu(L(c, 8)), 5)
    c = _leaky_relu(L(c, 9))
    c = _leaky_relu(L(c, 10))
    c = _leaky_relu(L(c, 11))
    return c


if __name__ == "__main__":
    key = jax.random.PRNGKey(0)
    k_p = jax.random.fold_in(key, 7)

    lin, bn = init_params(k_p)
    wide_slab, narrow_slab = fold_and_pack(lin, bn)

    # batch=8: single grid step; batch=40: 2 grid steps + padding path.
    for batch in (8, 40):
        ka, kb, km = jax.random.split(jax.random.fold_in(key, batch), 3)
        a = jax.random.normal(ka, (batch, STARTING_UNIT_TENSOR_SIZE), jnp.float32)
        b = jax.random.normal(kb, (batch, TARGET_UNIT_TENSOR_SIZE), jnp.float32)
        meta = jax.random.normal(km, (batch, META_SIZE), jnp.float32)

        out = jax.block_until_ready(net_forward(a, b, meta, wide_slab, narrow_slab))
        ref = net_forward_ref(a, b, meta, lin, bn)
        assert out.shape == (batch, 3)
        assert jnp.allclose(out, ref, atol=2e-2, rtol=2e-2), \
            f"Pallas output mismatch vs unfused reference (batch={batch})"

    print("KERNEL_OK")
</pallas_src>

<mosaic_0001>
module attributes {stable_mosaic.version = 11 : i64} {
  func.func @net_kernel(%arg0: i32, %arg1: memref<16x64xbf16, #tpu.memory_space<vmem>>, %arg2: memref<16x160xbf16, #tpu.memory_space<vmem>>, %arg3: memref<240x256xbf16, #tpu.memory_space<vmem>>, %arg4: memref<1744x128xbf16, #tpu.memory_space<vmem>>, %arg5: memref<16x128xbf16, #tpu.memory_space<vmem>>) attributes {dimension_semantics = [#tpu.dimension_semantics<parallel>], iteration_bounds = array<i64: 1>, scalar_prefetch = 0 : i64, scratch_operands = 0 : i64, tpu.core_type = #tpu.core_type<tc>, window_params = [{transform_indices = @transform_0, window_bounds = array<i64: 16, 64>}, {transform_indices = @transform_1, window_bounds = array<i64: 16, 160>}, {pipeline_mode = #tpu.pipeline_mode<synchronous>, transform_indices = @transform_2, window_bounds = array<i64: 240, 256>}, {pipeline_mode = #tpu.pipeline_mode<synchronous>, transform_indices = @transform_3, window_bounds = array<i64: 1744, 128>}, {transform_indices = @transform_4, window_bounds = array<i64: 16, 128>}]} {
    %c224 = arith.constant 224 : index
    %c0 = arith.constant 0 : index
    %0 = vector.load %arg3[%c224, %c0] : memref<240x256xbf16, #tpu.memory_space<vmem>>, vector<16x256xbf16>
    %1 = arith.extf %0 : vector<16x256xbf16> to vector<16x256xf32>
    %c1728 = arith.constant 1728 : index
    %c0_0 = arith.constant 0 : index
    %2 = vector.load %arg4[%c1728, %c0_0] : memref<1744x128xbf16, #tpu.memory_space<vmem>>, vector<16x128xbf16>
    %3 = arith.extf %2 : vector<16x128xbf16> to vector<16x128xf32>
    %c0_1 = arith.constant 0 : index
    %c0_2 = arith.constant 0 : index
    %4 = vector.load %arg1[%c0_1, %c0_2] : memref<16x64xbf16, #tpu.memory_space<vmem>>, vector<16x64xbf16>
    %c0_3 = arith.constant 0 : index
    %c0_4 = arith.constant 0 : index
    %5 = vector.load %arg2[%c0_3, %c0_4] : memref<16x160xbf16, #tpu.memory_space<vmem>>, vector<16x160xbf16>
    %c0_5 = arith.constant 0 : index
    %c0_6 = arith.constant 0 : index
    %6 = vector.load %arg3[%c0_5, %c0_6] : memref<240x256xbf16, #tpu.memory_space<vmem>>, vector<64x256xbf16>
    %cst = arith.constant dense<0.000000e+00> : vector<16x256xf32>
    %7 = tpu.matmul %4, %6, %cst {dimension_numbers = #tpu.dot_dimension_numbers<[1], [0], [0], [1], [0, 0, 1, 1], [], []>} : vector<16x64xbf16>, vector<64x256xbf16>, vector<16x256xf32> -> vector<16x256xf32>
    %8 = vector.extract_strided_slice %1 {offsets = [0, 0], sizes = [1, 256], strides = [1, 1]} : vector<16x256xf32> to vector<1x256xf32>
    %9 = vector.broadcast %8 : vector<1x256xf32> to vector<16x256xf32>
    %10 = arith.addf %7, %9 : vector<16x256xf32>
    %cst_7 = arith.constant 0.000000e+00 : f32
    %11 = vector.broadcast %cst_7 : f32 to vector<16x256xf32>
    %12 = arith.cmpf oge, %10, %11 : vector<16x256xf32>
    %cst_8 = arith.constant 0.00999999977 : f32
    %13 = vector.broadcast %cst_8 : f32 to vector<16x256xf32>
    %14 = arith.mulf %13, %10 : vector<16x256xf32>
    %15 = arith.select %12, %10, %14 : vector<16x256xi1>, vector<16x256xf32>
    %c64 = arith.constant 64 : index
    %c0_9 = arith.constant 0 : index
    %16 = vector.load %arg3[%c64, %c0_9] : memref<240x256xbf16, #tpu.memory_space<vmem>>, vector<160x256xbf16>
    %cst_10 = arith.constant dense<0.000000e+00> : vector<16x256xf32>
    %17 = tpu.matmul %5, %16, %cst_10 {dimension_numbers = #tpu.dot_dimension_numbers<[1], [0], [0], [1], [0, 0, 1, 1], [], []>} : vector<16x160xbf16>, vector<160x256xbf16>, vector<16x256xf32> -> vector<16x256xf32>
    %18 = vector.extract_strided_slice %1 {offsets = [1, 0], sizes = [1, 256], strides = [1, 1]} : vector<16x256xf32> to vector<1x256xf32>
    %19 = vector.broadcast %18 : vector<1x256xf32> to vector<16x256xf32>
    %20 = arith.addf %17, %19 : vector<16x256xf32>
    %cst_11 = arith.constant 0.000000e+00 : f32
    %21 = vector.broadcast %cst_11 : f32 to vector<16x256xf32>
    %22 = arith.cmpf oge, %20, %21 : vector<16x256xf32>
    %cst_12 = arith.constant 0.00999999977 : f32
    %23 = vector.broadcast %cst_12 : f32 to vector<16x256xf32>
    %24 = arith.mulf %23, %20 : vector<16x256xf32>
    %25 = arith.select %22, %20, %24 : vector<16x256xi1>, vector<16x256xf32>
    %26 = arith.truncf %15 : vector<16x256xf32> to vector<16x256xbf16>
    %c0_13 = arith.constant 0 : index
    %c0_14 = arith.constant 0 : index
    %27 = vector.load %arg4[%c0_13, %c0_14] : memref<1744x128xbf16, #tpu.memory_space<vmem>>, vector<256x128xbf16>
    %cst_15 = arith.constant dense<0.000000e+00> : vector<16x128xf32>
    %28 = tpu.matmul %26, %27, %cst_15 {dimension_numbers = #tpu.dot_dimension_numbers<[1], [0], [0], [1], [0, 0, 1, 1], [], []>} : vector<16x256xbf16>, vector<256x128xbf16>, vector<16x128xf32> -> vector<16x128xf32>
    %29 = arith.truncf %25 : vector<16x256xf32> to vector<16x256xbf16>
    %c256 = arith.constant 256 : index
    %c0_16 = arith.constant 0 : index
    %30 = vector.load %arg4[%c256, %c0_16] : memref<1744x128xbf16, #tpu.memory_space<vmem>>, vector<256x128xbf16>
    %cst_17 = arith.constant dense<0.000000e+00> : vector<16x128xf32>
    %31 = tpu.matmul %29, %30, %cst_17 {dimension_numbers = #tpu.dot_dimension_numbers<[1], [0], [0], [1], [0, 0, 1, 1], [], []>} : vector<16x256xbf16>, vector<256x128xbf16>, vector<16x128xf32> -> vector<16x128xf32>
    %32 = arith.addf %28, %31 : vector<16x128xf32>
    %c512 = arith.constant 512 : index
    %c0_18 = arith.constant 0 : index
    %33 = vector.load %arg4[%c512, %c0_18] : memref<1744x128xbf16, #tpu.memory_space<vmem>>, vector<64x128xbf16>
    %cst_19 = arith.constant dense<0.000000e+00> : vector<16x128xf32>
    %34 = tpu.matmul %4, %33, %cst_19 {dimension_numbers = #tpu.dot_dimension_numbers<[1], [0], [0], [1], [0, 0, 1, 1], [], []>} : vector<16x64xbf16>, vector<64x128xbf16>, vector<16x128xf32> -> vector<16x128xf32>
    %35 = arith.addf %32, %34 : vector<16x128xf32>
    %36 = vector.extract_strided_slice %3 {offsets = [0, 0], sizes = [1, 128], strides = [1, 1]} : vector<16x128xf32> to vector<1x128xf32>
    %37 = vector.broadcast %36 : vector<1x128xf32> to vector<16x128xf32>
    %38 = arith.addf %35, %37 : vector<16x128xf32>
    %cst_20 = arith.constant 0.000000e+00 : f32
    %39 = vector.broadcast %cst_20 : f32 to vector<16x128xf32>
    %40 = arith.cmpf oge, %38, %39 : vector<16x128xf32>
    %cst_21 = arith.constant 0.00999999977 : f32
    %41 = vector.broadcast %cst_21 : f32 to vector<16x128xf32>
    %42 = arith.mulf %41, %38 : vector<16x128xf32>
    %43 = arith.select %40, %38, %42 : vector<16x128xi1>, vector<16x128xf32>
    %44 = arith.truncf %43 : vector<16x128xf32> to vector<16x128xbf16>
    %c576 = arith.constant 576 : index
    %c0_22 = arith.constant 0 : index
    %45 = vector.load %arg4[%c576, %c0_22] : memref<1744x128xbf16, #tpu.memory_space<vmem>>, vector<128x128xbf16>
    %cst_23 = arith.constant dense<0.000000e+00> : vector<16x128xf32>
    %46 = tpu.matmul %44, %45, %cst_23 {dimension_numbers = #tpu.dot_dimension_numbers<[1], [0], [0], [1], [0, 0, 1, 1], [], []>} : vector<16x128xbf16>, vector<128x128xbf16>, vector<16x128xf32> -> vector<16x128xf32>
    %47 = vector.extract_strided_slice %3 {offsets = [1, 0], sizes = [1, 128], strides = [1, 1]} : vector<16x128xf32> to vector<1x128xf32>
    %48 = vector.broadcast %47 : vector<1x128xf32> to vector<16x128xf32>
    %49 = arith.addf %46, %48 : vector<16x128xf32>
    %cst_24 = arith.constant 0.000000e+00 : f32
    %50 = vector.broadcast %cst_24 : f32 to vector<16x128xf32>
    %51 = arith.cmpf oge, %49, %50 : vector<16x128xf32>
    %cst_25 = arith.constant 0.00999999977 : f32
    %52 = vector.broadcast %cst_25 : f32 to vector<16x128xf32>
    %53 = arith.mulf %52, %49 : vector<16x128xf32>
    %54 = arith.select %51, %49, %53 : vector<16x128xi1>, vector<16x128xf32>
    %55 = arith.truncf %54 : vector<16x128xf32> to vector<16x128xbf16>
    %c704 = arith.constant 704 : index
    %c0_26 = arith.constant 0 : index
    %56 = vector.load %arg4[%c704, %c0_26] : memref<1744x128xbf16, #tpu.memory_space<vmem>>, vector<128x128xbf16>
    %cst_27 = arith.constant dense<0.000000e+00> : vector<16x128xf32>
    %57 = tpu.matmul %55, %56, %cst_27 {dimension_numbers = #tpu.dot_dimension_numbers<[1], [0], [0], [1], [0, 0, 1, 1], [], []>} : vector<16x128xbf16>, vector<128x128xbf16>, vector<16x128xf32> -> vector<16x128xf32>
    %58 = vector.extract_strided_slice %3 {offsets = [2, 0], sizes = [1, 128], strides = [1, 1]} : vector<16x128xf32> to vector<1x128xf32>
    %59 = vector.broadcast %58 : vector<1x128xf32> to vector<16x128xf32>
    %60 = arith.addf %57, %59 : vector<16x128xf32>
    %cst_28 = arith.constant 0.000000e+00 : f32
    %61 = vector.broadcast %cst_28 : f32 to vector<16x128xf32>
    %62 = arith.cmpf oge, %60, %61 : vector<16x128xf32>
    %cst_29 = arith.constant 0.00999999977 : f32
    %63 = vector.broadcast %cst_29 : f32 to vector<16x128xf32>
    %64 = arith.mulf %63, %60 : vector<16x128xf32>
    %65 = arith.select %62, %60, %64 : vector<16x128xi1>, vector<16x128xf32>
    %66 = arith.truncf %65 : vector<16x128xf32> to vector<16x128xbf16>
    %c832 = arith.constant 832 : index
    %c0_30 = arith.constant 0 : index
    %67 = vector.load %arg4[%c832, %c0_30] : memref<1744x128xbf16, #tpu.memory_space<vmem>>, vector<128x128xbf16>
    %cst_31 = arith.constant dense<0.000000e+00> : vector<16x128xf32>
    %68 = tpu.matmul %66, %67, %cst_31 {dimension_numbers = #tpu.dot_dimension_numbers<[1], [0], [0], [1], [0, 0, 1, 1], [], []>} : vector<16x128xbf16>, vector<128x128xbf16>, vector<16x128xf32> -> vector<16x128xf32>
    %69 = vector.extract_strided_slice %3 {offsets = [3, 0], sizes = [1, 128], strides = [1, 1]} : vector<16x128xf32> to vector<1x128xf32>
    %70 = vector.broadcast %69 : vector<1x128xf32> to vector<16x128xf32>
    %71 = arith.addf %68, %70 : vector<16x128xf32>
    %cst_32 = arith.constant 0.000000e+00 : f32
    %72 = vector.broadcast %cst_32 : f32 to vector<16x128xf32>
    %73 = arith.cmpf oge, %71, %72 : vector<16x128xf32>
    %cst_33 = arith.constant 0.00999999977 : f32
    %74 = vector.broadcast %cst_33 : f32 to vector<16x128xf32>
    %75 = arith.mulf %74, %71 : vector<16x128xf32>
    %76 = arith.select %73, %71, %75 : vector<16x128xi1>, vector<16x128xf32>
    %77 = arith.truncf %76 : vector<16x128xf32> to vector<16x128xbf16>
    %c960 = arith.constant 960 : index
    %c0_34 = arith.constant 0 : index
    %78 = vector.load %arg4[%c960, %c0_34] : memref<1744x128xbf16, #tpu.memory_space<vmem>>, vector<128x128xbf16>
    %cst_35 = arith.constant dense<0.000000e+00> : vector<16x128xf32>
    %79 = tpu.matmul %77, %78, %cst_35 {dimension_numbers = #tpu.dot_dimension_numbers<[1], [0], [0], [1], [0, 0, 1, 1], [], []>} : vector<16x128xbf16>, vector<128x128xbf16>, vector<16x128xf32> -> vector<16x128xf32>
    %80 = vector.extract_strided_slice %3 {offsets = [4, 0], sizes = [1, 128], strides = [1, 1]} : vector<16x128xf32> to vector<1x128xf32>
    %81 = vector.broadcast %80 : vector<1x128xf32> to vector<16x128xf32>
    %82 = arith.addf %79, %81 : vector<16x128xf32>
    %cst_36 = arith.constant 0.000000e+00 : f32
    %83 = vector.broadcast %cst_36 : f32 to vector<16x128xf32>
    %84 = arith.cmpf oge, %82, %83 : vector<16x128xf32>
    %cst_37 = arith.constant 0.00999999977 : f32
    %85 = vector.broadcast %cst_37 : f32 to vector<16x128xf32>
    %86 = arith.mulf %85, %82 : vector<16x128xf32>
    %87 = arith.select %84, %82, %86 : vector<16x128xi1>, vector<16x128xf32>
    %88 = arith.truncf %87 : vector<16x128xf32> to vector<16x128xbf16>
    %c1088 = arith.constant 1088 : index
    %c0_38 = arith.constant 0 : index
    %89 = vector.load %arg4[%c1088, %c0_38] : memref<1744x128xbf16, #tpu.memory_space<vmem>>, vector<128x128xbf16>
    %cst_39 = arith.constant dense<0.000000e+00> : vector<16x128xf32>
    %90 = tpu.matmul %88, %89, %cst_39 {dimension_numbers = #tpu.dot_dimension_numbers<[1], [0], [0], [1], [0, 0, 1, 1], [], []>} : vector<16x128xbf16>, vector<128x128xbf16>, vector<16x128xf32> -> vector<16x128xf32>
    %91 = vector.extract_strided_slice %3 {offsets = [5, 0], sizes = [1, 128], strides = [1, 1]} : vector<16x128xf32> to vector<1x128xf32>
    %92 = vector.broadcast %91 : vector<1x128xf32> to vector<16x128xf32>
    %93 = arith.addf %90, %92 : vector<16x128xf32>
    %cst_40 = arith.constant 0.000000e+00 : f32
    %94 = vector.broadcast %cst_40 : f32 to vector<16x128xf32>
    %95 = arith.cmpf oge, %93, %94 : vector<16x128xf32>
    %cst_41 = arith.constant 0.00999999977 : f32
    %96 = vector.broadcast %cst_41 : f32 to vector<16x128xf32>
    %97 = arith.mulf %96, %93 : vector<16x128xf32>
    %98 = arith.select %95, %93, %97 : vector<16x128xi1>, vector<16x128xf32>
    %99 = arith.truncf %98 : vector<16x128xf32> to vector<16x128xbf16>
    %c1216 = arith.constant 1216 : index
    %c0_42 = arith.constant 0 : index
    %100 = vector.load %arg4[%c1216, %c0_42] : memref<1744x128xbf16, #tpu.memory_space<vmem>>, vector<128x128xbf16>
    %cst_43 = arith.constant dense<0.000000e+00> : vector<16x128xf32>
    %101 = tpu.matmul %99, %100, %cst_43 {dimension_numbers = #tpu.dot_dimension_numbers<[1], [0], [0], [1], [0, 0, 1, 1], [], []>} : vector<16x128xbf16>, vector<128x128xbf16>, vector<16x128xf32> -> vector<16x128xf32>
    %102 = vector.extract_strided_slice %3 {offsets = [6, 0], sizes = [1, 128], strides = [1, 1]} : vector<16x128xf32> to vector<1x128xf32>
    %103 = vector.broadcast %102 : vector<1x128xf32> to vector<16x128xf32>
    %104 = arith.addf %101, %103 : vector<16x128xf32>
    %cst_44 = arith.constant 0.000000e+00 : f32
    %105 = vector.broadcast %cst_44 : f32 to vector<16x128xf32>
    %106 = arith.cmpf oge, %104, %105 : vector<16x128xf32>
    %cst_45 = arith.constant 0.00999999977 : f32
    %107 = vector.broadcast %cst_45 : f32 to vector<16x128xf32>
    %108 = arith.mulf %107, %104 : vector<16x128xf32>
    %109 = arith.select %106, %104, %108 : vector<16x128xi1>, vector<16x128xf32>
    %110 = arith.truncf %109 : vector<16x128xf32> to vector<16x128xbf16>
    %c1344 = arith.constant 1344 : index
    %c0_46 = arith.constant 0 : index
    %111 = vector.load %arg4[%c1344, %c0_46] : memref<1744x128xbf16, #tpu.memory_space<vmem>>, vector<128x128xbf16>
    %cst_47 = arith.constant dense<0.000000e+00> : vector<16x128xf32>
    %112 = tpu.matmul %110, %111, %cst_47 {dimension_numbers = #tpu.dot_dimension_numbers<[1], [0], [0], [1], [0, 0, 1, 1], [], []>} : vector<16x128xbf16>, vector<128x128xbf16>, vector<16x128xf32> -> vector<16x128xf32>
    %113 = vector.extract_strided_slice %3 {offsets = [7, 0], sizes = [1, 128], strides = [1, 1]} : vector<16x128xf32> to vector<1x128xf32>
    %114 = vector.broadcast %113 : vector<1x128xf32> to vector<16x128xf32>
    %115 = arith.addf %112, %114 : vector<16x128xf32>
    %cst_48 = arith.constant 0.000000e+00 : f32
    %116 = vector.broadcast %cst_48 : f32 to vector<16x128xf32>
    %117 = arith.cmpf oge, %115, %116 : vector<16x128xf32>
    %cst_49 = arith.constant 0.00999999977 : f32
    %118 = vector.broadcast %cst_49 : f32 to vector<16x128xf32>
    %119 = arith.mulf %118, %115 : vector<16x128xf32>
    %120 = arith.select %117, %115, %119 : vector<16x128xi1>, vector<16x128xf32>
    %121 = arith.truncf %120 : vector<16x128xf32> to vector<16x128xbf16>
    %c1472 = arith.constant 1472 : index
    %c0_50 = arith.constant 0 : index
    %122 = vector.load %arg4[%c1472, %c0_50] : memref<1744x128xbf16, #tpu.memory_space<vmem>>, vector<128x128xbf16>
    %cst_51 = arith.constant dense<0.000000e+00> : vector<16x128xf32>
    %123 = tpu.matmul %121, %122, %cst_51 {dimension_numbers = #tpu.dot_dimension_numbers<[1], [0], [0], [1], [0, 0, 1, 1], [], []>} : vector<16x128xbf16>, vector<128x128xbf16>, vector<16x128xf32> -> vector<16x128xf32>
    %124 = vector.extract_strided_slice %3 {offsets = [8, 0], sizes = [1, 128], strides = [1, 1]} : vector<16x128xf32> to vector<1x128xf32>
    %125 = vector.broadcast %124 : vector<1x128xf32> to vector<16x128xf32>
    %126 = arith.addf %123, %125 : vector<16x128xf32>
    %cst_52 = arith.constant 0.000000e+00 : f32
    %127 = vector.broadcast %cst_52 : f32 to vector<16x128xf32>
    %128 = arith.cmpf oge, %126, %127 : vector<16x128xf32>
    %cst_53 = arith.constant 0.00999999977 : f32
    %129 = vector.broadcast %cst_53 : f32 to vector<16x128xf32>
    %130 = arith.mulf %129, %126 : vector<16x128xf32>
    %131 = arith.select %128, %126, %130 : vector<16x128xi1>, vector<16x128xf32>
    %132 = arith.truncf %131 : vector<16x128xf32> to vector<16x128xbf16>
    %c1600 = arith.constant 1600 : index
    %c0_54 = arith.constant 0 : index
    %133 = vector.load %arg4[%c1600, %c0_54] : memref<1744x128xbf16, #tpu.memory_space<vmem>>, vector<128x128xbf16>
    %cst_55 = arith.constant dense<0.000000e+00> : vector<16x128xf32>
    %134 = tpu.matmul %132, %133, %cst_55 {dimension_numbers = #tpu.dot_dimension_numbers<[1], [0], [0], [1], [0, 0, 1, 1], [], []>} : vector<16x128xbf16>, vector<128x128xbf16>, vector<16x128xf32> -> vector<16x128xf32>
    %135 = vector.extract_strided_slice %3 {offsets = [9, 0], sizes = [1, 128], strides = [1, 1]} : vector<16x128xf32> to vector<1x128xf32>
    %136 = vector.broadcast %135 : vector<1x128xf32> to vector<16x128xf32>
    %137 = arith.addf %134, %136 : vector<16x128xf32>
    %cst_56 = arith.constant 0.000000e+00 : f32
    %138 = vector.broadcast %cst_56 : f32 to vector<16x128xf32>
    %139 = arith.cmpf oge, %137, %138 : vector<16x128xf32>
    %cst_57 = arith.constant 0.00999999977 : f32
    %140 = vector.broadcast %cst_57 : f32 to vector<16x128xf32>
    %141 = arith.mulf %140, %137 : vector<16x128xf32>
    %142 = arith.select %139, %137, %141 : vector<16x128xi1>, vector<16x128xf32>
    %143 = arith.truncf %142 : vector<16x128xf32> to vector<16x128xbf16>
    %c0_58 = arith.constant 0 : index
    %c0_59 = arith.constant 0 : index
    %144 = vector.load %arg5[%c0_58, %c0_59] : memref<16x128xbf16, #tpu.memory_space<vmem>>, vector<16x128xbf16>
    tpu.vector_store %arg5[%c0_58, %c0_59], %143 {strides = array<i32>} : memref<16x128xbf16, #tpu.memory_space<vmem>>, vector<16x128xbf16>,
    return
  }
  func.func @transform_0(%arg0: i32) -> (i32, i32) {
    %c0_i32 = arith.constant 0 : i32
    %c0_i32_0 = arith.constant 0 : i32
    return %arg0, %c0_i32 : i32, i32
  }
  func.func @transform_1(%arg0: i32) -> (i32, i32) {
    %c0_i32 = arith.constant 0 : i32
    %c0_i32_0 = arith.constant 0 : i32
    return %arg0, %c0_i32 : i32, i32
  }
  func.func @transform_2(%arg0: i32) -> (i32, i32) {
    %c0_i32 = arith.constant 0 : i32
    %c0_i32_0 = arith.constant 0 : i32
    %c0_i32_1 = arith.constant 0 : i32
    return %c0_i32, %c0_i32_0 : i32, i32
  }
  func.func @transform_3(%arg0: i32) -> (i32, i32) {
    %c0_i32 = arith.constant 0 : i32
    %c0_i32_0 = arith.constant 0 : i32
    %c0_i32_1 = arith.constant 0 : i32
    return %c0_i32, %c0_i32_0 : i32, i32
  }
  func.func @transform_4(%arg0: i32) -> (i32, i32) {
    %c0_i32 = arith.constant 0 : i32
    %c0_i32_0 = arith.constant 0 : i32
    return %arg0, %c0_i32 : i32, i32
  }
}

</mosaic_0001>

<llo_original>
// kernel: net_forward.1
$region0: #{net_forward.1}
  #allocation0 [shape = 'u32[]', space=smem, size = 0x4, offset = 0x4, fixed_abs, tag = 'smem constant byte address 0x4 - core index']
  #allocation1 [shape = 'u32[72,128]{1,0:T(1,128)}', space=vmem, size = 0x9000, scoped, tag = 'internal scratch']
  %s0 = inlined_call_operand.vmem [shape: bf16[16,64], index: 0, kind: input, shape index: {}]
  %s1 = inlined_call_operand.vmem [shape: bf16[16,160], index: 1, kind: input, shape index: {}]
  %s2 = inlined_call_operand.hbm [shape: bf16[240,256], index: 2, kind: input, shape index: {}]
  %s3 = inlined_call_operand.hbm [shape: bf16[1744,128], index: 3, kind: input, shape index: {}]
  %s4 = inlined_call_operand.vmem [shape: bf16[16,128], index: 4, kind: output, shape index: {}]
  %s5 = sld [smem:[#allocation0]]
  $region34: #{net_forward.1} parent=0
    _
  %s7 = ssub.s32 1, %s5
  %s8 = scalar_select 0, %s7, %s5
  $region1: #{net_forward.1} parent=0
    #allocation2 [shape = 'u8[122880]{0}', space=vmem, size = 0x1e000, scoped, tag = 'input window, operand 2, single buffered']
    #allocation3 [shape = 's32[1]{0}', space=sflag, size = 0x4, scoped, tag = 'scoped memory for net_forward.1']
    #allocation4 [shape = 'u8[446464]{0}', space=vmem, size = 0x6d000, scoped, tag = 'input window, operand 3, single buffered']
    #allocation5 [shape = 's32[1]{0}', space=sflag, size = 0x4, scoped, tag = 'scoped memory for net_forward.1']
    %9 = vsyncpa [#allocation3], 0
    %10 = vsyncpa [#allocation5], 0
    // Predicated region
    $region2: #{net_forward.1} parent=1 // pred_check
      _
    $region3: #{net_forward.1} parent=1 // pred_check_branch
      %12 = sbr.rel (0) target = $region5
    $region4: #{net_forward.1} parent=1 // pred_region
      _
    $region5: #{net_forward.1} parent=1 // pred_fallthru
      _
    // Predicated region
    $region6: #{net_forward.1} parent=1 // pred_check
      _
    $region7: #{net_forward.1} parent=1 // pred_check_branch
      %14 = sbr.rel (0) target = $region9
    $region8: #{net_forward.1} parent=1 // pred_region
      _
    $region9: #{net_forward.1} parent=1 // pred_fallthru
      _
    // Predicated region
    $region10: #{net_forward.1} parent=1 // pred_check
      _
    $region11: #{net_forward.1} parent=1 // pred_check_branch
      %16 = sbr.rel (0) target = $region13
    $region12: #{net_forward.1} parent=1 // pred_region
      %18 = vsyncadd [#allocation3], 0
      %s19 = sshll.u32 %s2, 4
      %s20 = int_to_ptr.hbm [resolvable:$true] %s19
      %s21 = sshll.u32 [#allocation2], 4
      %s22 = int_to_ptr.vmem [resolvable:$true] %s21
      %27 = dma.hbm_to_vmem [thread:$0]  %s20, 3840, %s22, [#allocation3], 128, 128, 8
    $region13: #{net_forward.1} parent=1 // pred_fallthru
      _
    // Predicated region
    $region14: #{net_forward.1} parent=1 // pred_check
      _
    $region15: #{net_forward.1} parent=1 // pred_check_branch
      %29 = sbr.rel (0) target = $region17
    $region16: #{net_forward.1} parent=1 // pred_region
      %31 = vsyncadd [#allocation5], 0
      %s32 = sshll.u32 %s3, 4
      %s33 = int_to_ptr.hbm [resolvable:$true] %s32
      %s34 = sshll.u32 [#allocation4], 4
      %s35 = int_to_ptr.vmem [resolvable:$true] %s34
      %40 = dma.hbm_to_vmem [thread:$0]  %s33, 13952, %s35, [#allocation5], 64, 64, 4
    $region17: #{net_forward.1} parent=1 // pred_fallthru
      _
    // Predicated region
    $region18: #{net_forward.1} parent=1 // pred_check
      _
    $region19: #{net_forward.1} parent=1 // pred_check_branch
      %42 = sbr.rel (0) target = $region21
    $region20: #{net_forward.1} parent=1 // pred_region
      %44 = dma.done [#allocation3], 3840
    $region21: #{net_forward.1} parent=1 // pred_fallthru
      _
    // Predicated region
    $region22: #{net_forward.1} parent=1 // pred_check
      _
    $region23: #{net_forward.1} parent=1 // pred_check_branch
      %46 = sbr.rel (0) target = $region25
    $region24: #{net_forward.1} parent=1 // pred_region
      %48 = dma.done [#allocation5], 13952
    $region25: #{net_forward.1} parent=1 // pred_fallthru
      _
    %v50 = vld [vmem:[#allocation2 + $0xe0] sm:$0xff]
    %v51 = vunpack.c.l.bf16 %v50
    %v52 = vunpack.c.h.bf16 %v50
    %v53 = vld [vmem:[#allocation4 + $0x360] sm:$0xf]
    %v54 = vld [vmem:[#allocation4 + $0x364] sm:$0xf]
    %v55 = vunpack.c.l.bf16 %v53
    %v56 = vunpack.c.l.bf16 %v54
    %v57 = vld [vmem:[%s0] sm:$0xf]
    %v58 = vld [vmem:[%s0 + $0x4] sm:$0xf]
    %v59 = vld [vmem:[%s1] sm:$0xff]
    %v60 = vld [vmem:[%s1 + $0x8] sm:$0xff]
    %v61 = vld [vmem:[#allocation2] sm:$0xff]
    %v62 = vld [vmem:[#allocation2 + $0x8] sm:$0xff]
    %v63 = vld [vmem:[#allocation2 + $0x10] sm:$0xff]
    %v64 = vld [vmem:[#allocation2 + $0x18] sm:$0xff]
    %v65 = vld [vmem:[#allocation2 + $0x20] sm:$0xff]
    %v66 = vld [vmem:[#allocation2 + $0x28] sm:$0xff]
    %v67 = vld [vmem:[#allocation2 + $0x30] sm:$0xff]
    %v68 = vld [vmem:[#allocation2 + $0x38] sm:$0xff]
    %v69 = vperm.slane %v51, 0
    %v70 = vperm.slane %v52, 0
    %v73 = vunpack.c.l.b16 %v57
    %v74 = vunpack.c.l.b16 %v58
    %v75 = vpack.c.b16 %v74, %v73
    %v84 = vunpack.c.l.b16 %v61
    %v85 = vunpack.c.h.b16 %v61
    %v86 = vunpack.c.l.b16 %v62
    %v87 = vunpack.c.h.b16 %v62
    %v88 = vunpack.c.l.b16 %v63
    %v89 = vunpack.c.h.b16 %v63
    %v90 = vunpack.c.l.b16 %v64
    %v91 = vunpack.c.h.b16 %v64
    %v92 = vunpack.c.l.b16 %v65
    %v93 = vunpack.c.h.b16 %v65
    %v94 = vunpack.c.l.b16 %v66
    %v95 = vunpack.c.h.b16 %v66
    %v96 = vunpack.c.l.b16 %v67
    %v97 = vunpack.c.h.b16 %v67
    %v98 = vunpack.c.l.b16 %v68
    %v99 = vunpack.c.h.b16 %v68
    %v100 = vpack.c.b16 %v86, %v84
    %v101 = vpack.c.b16 %v87, %v85
    %v102 = vpack.c.b16 %v90, %v88
    %v103 = vpack.c.b16 %v91, %v89
    %v104 = vpack.c.b16 %v94, %v92
    %v105 = vpack.c.b16 %v95, %v93
    %v106 = vpack.c.b16 %v98, %v96
    %v107 = vpack.c.b16 %v99, %v97
    %vm116 = vcmask 523264
    %v118 = vsel %vm116, %v75, 0
    %120 = vmatpush.bf16.msra.mxu0 0
    %121 = vmatpush.bf16.msra.mxu0 0
    %122 = vmatpush.bf16.msra.mxu0 0
    %123 = vmatpush.bf16.msra.mxu0 0
    %124 = vmatpush.bf16.msra.mxu0 %v106
    %125 = vmatpush.bf16.msra.mxu0 %v104
    %126 = vmatpush.bf16.msra.mxu0 %v102
    %127 = vmatpush.bf16.msra.mxu0 %v100
    %128 = vmatmul.bf16.gmra.mxu0 %v118
    %v129 = vpop.f32.mrf.mxu0
    %v130 = vadd.f32 %v69, %v129
    %v131 = vpop.f32.mrf.mxu0
    %v132 = vadd.f32 %v69, %v131
    %133 = vdwg.mxu0
    %134 = vmatpush.bf16.msra.mxu0 0
    %135 = vmatpush.bf16.msra.mxu0 0
    %136 = vmatpush.bf16.msra.mxu0 0
    %137 = vmatpush.bf16.msra.mxu0 0
    %138 = vmatpush.bf16.msra.mxu0 %v107
    %139 = vmatpush.bf16.msra.mxu0 %v105
    %140 = vmatpush.bf16.msra.mxu0 %v103
    %141 = vmatpush.bf16.msra.mxu0 %v101
    %142 = vmatmul.bf16.gmra.mxu0 %v118
    %v143 = vpop.f32.mrf.mxu0
    %v144 = vadd.f32 %v70, %v143
    %v145 = vpop.f32.mrf.mxu0
    %v146 = vadd.f32 %v70, %v145
    %147 = vdwg.mxu0
    %vm148 = vcmp.ge.f32.partialorder %v130, 0.0
    %vm149 = vcmp.ge.f32.partialorder %v144, 0.0
    %vm150 = vcmp.ge.f32.partialorder %v132, 0.0
    %vm151 = vcmp.ge.f32.partialorder %v146, 0.0
    %v152 = vmul.f32 %v130, 0.01
    %v153 = vmul.f32 %v144, 0.01
    %v154 = vmul.f32 %v132, 0.01
    %v155 = vmul.f32 %v146, 0.01
    %v156 = vsel %vm148, %v130, %v152
    %v157 = vsel %vm149, %v144, %v153
    %v158 = vsel %vm150, %v132, %v154
    %v159 = vsel %vm151, %v146, %v155
    %v160 = vld [vmem:[#allocation2 + $0x40] sm:$0xff]
    %v161 = vld [vmem:[#allocation2 + $0x48] sm:$0xff]
    %v162 = vld [vmem:[#allocation2 + $0x50] sm:$0xff]
    %v163 = vld [vmem:[#allocation2 + $0x58] sm:$0xff]
    %v164 = vld [vmem:[#allocation2 + $0x60] sm:$0xff]
    %v165 = vld [vmem:[#allocation2 + $0x68] sm:$0xff]
    %v166 = vld [vmem:[#allocation2 + $0x70] sm:$0xff]
    %v167 = vld [vmem:[#allocation2 + $0x78] sm:$0xff]
    %v168 = vld [vmem:[#allocation2 + $0x80] sm:$0xff]
    %v169 = vld [vmem:[#allocation2 + $0x88] sm:$0xff]
    %v170 = vld [vmem:[#allocation2 + $0x90] sm:$0xff]
    %v171 = vld [vmem:[#allocation2 + $0x98] sm:$0xff]
    %v172 = vld [vmem:[#allocation2 + $0xa0] sm:$0xff]
    %v173 = vld [vmem:[#allocation2 + $0xa8] sm:$0xff]
    %v174 = vld [vmem:[#allocation2 + $0xb0] sm:$0xff]
    %v175 = vld [vmem:[#allocation2 + $0xb8] sm:$0xff]
    %v176 = vld [vmem:[#allocation2 + $0xc0] sm:$0xff]
    %v177 = vld [vmem:[#allocation2 + $0xc8] sm:$0xff]
    %v178 = vld [vmem:[#allocation2 + $0xd0] sm:$0xff]
    %v179 = vld [vmem:[#allocation2 + $0xd8] sm:$0xff]
    %v180 = vperm.slane %v51, 1
    %v181 = vperm.slane %v52, 1
    %v184 = vunpack.c.l.b16 %v59
    %v185 = vunpack.c.h.b16 %v59
    %v186 = vunpack.c.l.b16 %v60
    %v187 = vunpack.c.h.b16 %v60
    %v188 = vpack.c.b16 %v186, %v184
    %v189 = vpack.c.b16 %v187, %v185
    %v211 = vunpack.c.l.b16 %v160
    %v212 = vunpack.c.h.b16 %v160
    %v213 = vunpack.c.l.b16 %v161
    %v214 = vunpack.c.h.b16 %v161
    %v215 = vunpack.c.l.b16 %v162
    %v216 = vunpack.c.h.b16 %v162
    %v217 = vunpack.c.l.b16 %v163
    %v218 = vunpack.c.h.b16 %v163
    %v219 = vunpack.c.l.b16 %v164
    %v220 = vunpack.c.h.b16 %v164
    %v221 = vunpack.c.l.b16 %v165
    %v222 = vunpack.c.h.b16 %v165
    %v223 = vunpack.c.l.b16 %v166
    %v224 = vunpack.c.h.b16 %v166
    %v225 = vunpack.c.l.b16 %v167
    %v226 = vunpack.c.h.b16 %v167
    %v227 = vunpack.c.l.b16 %v168
    %v228 = vunpack.c.h.b16 %v168
    %v229 = vunpack.c.l.b16 %v169
    %v230 = vunpack.c.h.b16 %v169
    %v231 = vunpack.c.l.b16 %v170
    %v232 = vunpack.c.h.b16 %v170
    %v233 = vunpack.c.l.b16 %v171
    %v234 = vunpack.c.h.b16 %v171
    %v235 = vunpack.c.l.b16 %v172
    %v236 = vunpack.c.h.b16 %v172
    %v237 = vunpack.c.l.b16 %v173
    %v238 = vunpack.c.h.b16 %v173
    %v239 = vunpack.c.l.b16 %v174
    %v240 = vunpack.c.h.b16 %v174
    %v241 = vunpack.c.l.b16 %v175
    %v242 = vunpack.c.h.b16 %v175
    %v243 = vunpack.c.l.b16 %v176
    %v244 = vunpack.c.h.b16 %v176
    %v245 = vunpack.c.l.b16 %v177
    %v246 = vunpack.c.h.b16 %v177
    %v247 = vunpack.c.l.b16 %v178
    %v248 = vunpack.c.h.b16 %v178
    %v249 = vunpack.c.l.b16 %v179
    %v250 = vunpack.c.h.b16 %v179
    %v251 = vpack.c.b16 %v213, %v211
    %v252 = vpack.c.b16 %v214, %v212
    %v253 = vpack.c.b16 %v217, %v215
    %v254 = vpack.c.b16 %v218, %v216
    %v255 = vpack.c.b16 %v221, %v219
    %v256 = vpack.c.b16 %v222, %v220
    %v257 = vpack.c.b16 %v225, %v223
    %v258 = vpack.c.b16 %v226, %v224
    %v259 = vpack.c.b16 %v229, %v227
    %v260 = vpack.c.b16 %v230, %v228
    %v261 = vpack.c.b16 %v233, %v231
    %v262 = vpack.c.b16 %v234, %v232
    %v263 = vpack.c.b16 %v237, %v235
    %v264 = vpack.c.b16 %v238, %v236
    %v265 = vpack.c.b16 %v241, %v239
    %v266 = vpack.c.b16 %v242, %v240
    %v267 = vpack.c.b16 %v245, %v243
    %v268 = vpack.c.b16 %v246, %v244
    %v269 = vpack.c.b16 %v249, %v247
    %v270 = vpack.c.b16 %v250, %v248
    %vm291 = vcmask 261120
    %v293 = vsel %vm291, %v189, 0
    %295 = vmatpush.bf16.msra.mxu0 %v265
    %296 = vmatpush.bf16.msra.mxu0 %v263
    %297 = vmatpush.bf16.msra.mxu0 %v261
    %298 = vmatpush.bf16.msra.mxu0 %v259
    %299 = vmatpush.bf16.msra.mxu0 %v257
    %300 = vmatpush.bf16.msra.mxu0 %v255
    %301 = vmatpush.bf16.msra.mxu0 %v253
    %302 = vmatpush.bf16.msra.mxu0 %v251
    %303 = vmatmul.bf16.gmra.mxu0 %v188
    %v304 = vpop.f32.mrf.mxu0
    %v305 = vadd.f32 %v180, %v304
    %v306 = vpop.f32.mrf.mxu0
    %v307 = vadd.f32 %v180, %v306
    %308 = vdwg.mxu0
    %309 = vmatpush.bf16.msra.mxu0 0
    %310 = vmatpush.bf16.msra.mxu0 0
    %311 = vmatpush.bf16.msra.mxu0 0
    %312 = vmatpush.bf16.msra.mxu0 0
    %313 = vmatpush.bf16.msra.mxu0 0
    %314 = vmatpush.bf16.msra.mxu0 0
    %315 = vmatpush.bf16.msra.mxu0 %v269
    %316 = vmatpush.bf16.msra.mxu0 %v267
    %317 = vmatmul.bf16.gmra.mxu0 %v293
    %v318 = vpop.f32.mrf.mxu0
    %v319 = vadd.f32 %v305, %v318
    %v320 = vpop.f32.mrf.mxu0
    %v321 = vadd.f32 %v307, %v320
    %322 = vdwg.mxu0
    %323 = vmatpush.bf16.msra.mxu0 %v266
    %324 = vmatpush.bf16.msra.mxu0 %v264
    %325 = vmatpush.bf16.msra.mxu0 %v262
    %326 = vmatpush.bf16.msra.mxu0 %v260
    %327 = vmatpush.bf16.msra.mxu0 %v258
    %328 = vmatpush.bf16.msra.mxu0 %v256
    %329 = vmatpush.bf16.msra.mxu0 %v254
    %330 = vmatpush.bf16.msra.mxu0 %v252
    %331 = vmatmul.bf16.gmra.mxu0 %v188
    %v332 = vpop.f32.mrf.mxu0
    %v333 = vadd.f32 %v181, %v332
    %v334 = vpop.f32.mrf.mxu0
    %v335 = vadd.f32 %v181, %v334
    %336 = vdwg.mxu0
    %337 = vmatpush.bf16.msra.mxu0 0
    %338 = vmatpush.bf16.msra.mxu0 0
    %339 = vmatpush.bf16.msra.mxu0 0
    %340 = vmatpush.bf16.msra.mxu0 0
    %341 = vmatpush.bf16.msra.mxu0 0
    %342 = vmatpush.bf16.msra.mxu0 0
    %343 = vmatpush.bf16.msra.mxu0 %v270
    %344 = vmatpush.bf16.msra.mxu0 %v268
    %345 = vmatmul.bf16.gmra.mxu0 %v293
    %v346 = vpop.f32.mrf.mxu0
    %v347 = vadd.f32 %v333, %v346
    %v348 = vpop.f32.mrf.mxu0
    %v349 = vadd.f32 %v335, %v348
    %350 = vdwg.mxu0
    %vm351 = vcmp.ge.f32.partialorder %v319, 0.0
    %vm352 = vcmp.ge.f32.partialorder %v347, 0.0
    %vm353 = vcmp.ge.f32.partialorder %v321, 0.0
    %vm354 = vcmp.ge.f32.partialorder %v349, 0.0
    %v355 = vmul.f32 %v319, 0.01
    %v356 = vmul.f32 %v347, 0.01
    %v357 = vmul.f32 %v321, 0.01
    %v358 = vmul.f32 %v349, 0.01
    %v359 = vsel %vm351, %v319, %v355
    %v360 = vsel %vm352, %v347, %v356
    %v361 = vsel %vm353, %v321, %v357
    %v362 = vsel %vm354, %v349, %v358
    %v363 = vpack.c.bf16 %v158, %v156
    %v364 = vpack.c.bf16 %v159, %v157
    %v365 = vld [vmem:[#allocation4] sm:$0xf]
    %v366 = vld [vmem:[#allocation4 + $0x4] sm:$0xf]
    %v367 = vld [vmem:[#allocation4 + $0x8] sm:$0xf]
    %v368 = vld [vmem:[#allocation4 + $0xc] sm:$0xf]
    %v369 = vld [vmem:[#allocation4 + $0x10] sm:$0xf]
    %v370 = vld [vmem:[#allocation4 + $0x14] sm:$0xf]
    %v371 = vld [vmem:[#allocation4 + $0x18] sm:$0xf]
    %v372 = vld [vmem:[#allocation4 + $0x1c] sm:$0xf]
    %v373 = vld [vmem:[#allocation4 + $0x20] sm:$0xf]
    %v374 = vld [vmem:[#allocation4 + $0x24] sm:$0xf]
    %v375 = vld [vmem:[#allocation4 + $0x28] sm:$0xf]
    %v376 = vld [vmem:[#allocation4 + $0x2c] sm:$0xf]
    %v377 = vld [vmem:[#allocation4 + $0x30] sm:$0xf]
    %v378 = vld [vmem:[#allocation4 + $0x34] sm:$0xf]
    %v379 = vld [vmem:[#allocation4 + $0x38] sm:$0xf]
    %v380 = vld [vmem:[#allocation4 + $0x3c] sm:$0xf]
    %v381 = vld [vmem:[#allocation4 + $0x40] sm:$0xf]
    %v382 = vld [vmem:[#allocation4 + $0x44] sm:$0xf]
    %v383 = vld [vmem:[#allocation4 + $0x48] sm:$0xf]
    %v384 = vld [vmem:[#allocation4 + $0x4c] sm:$0xf]
    %v385 = vld [vmem:[#allocation4 + $0x50] sm:$0xf]
    %v386 = vld [vmem:[#allocation4 + $0x54] sm:$0xf]
    %v387 = vld [vmem:[#allocation4 + $0x58] sm:$0xf]
    %v388 = vld [vmem:[#allocation4 + $0x5c] sm:$0xf]
    %v389 = vld [vmem:[#allocation4 + $0x60] sm:$0xf]
    %v390 = vld [vmem:[#allocation4 + $0x64] sm:$0xf]
    %v391 = vld [vmem:[#allocation4 + $0x68] sm:$0xf]
    %v392 = vld [vmem:[#allocation4 + $0x6c] sm:$0xf]
    %v393 = vld [vmem:[#allocation4 + $0x70] sm:$0xf]
    %v394 = vld [vmem:[#allocation4 + $0x74] sm:$0xf]
    %v395 = vld [vmem:[#allocation4 + $0x78] sm:$0xf]
    %v396 = vld [vmem:[#allocation4 + $0x7c] sm:$0xf]
    %v397 = vpack.c.bf16 %v361, %v359
    %v398 = vpack.c.bf16 %v362, %v360
    %v399 = vld [vmem:[#allocation4 + $0x80] sm:$0xf]
    %v400 = vld [vmem:[#allocation4 + $0x84] sm:$0xf]
    %v401 = vld [vmem:[#allocation4 + $0x88] sm:$0xf]
    %v402 = vld [vmem:[#allocation4 + $0x8c] sm:$0xf]
    %v403 = vld [vmem:[#allocation4 + $0x90] sm:$0xf]
    %v404 = vld [vmem:[#allocation4 + $0x94] sm:$0xf]
    %v405 = vld [vmem:[#allocation4 + $0x98] sm:$0xf]
    %v406 = vld [vmem:[#allocation4 + $0x9c] sm:$0xf]
    %v407 = vld [vmem:[#allocation4 + $0xa0] sm:$0xf]
    %v408 = vld [vmem:[#allocation4 + $0xa4] sm:$0xf]
    %v409 = vld [vmem:[#allocation4 + $0xa8] sm:$0xf]
    %v410 = vld [vmem:[#allocation4 + $0xac] sm:$0xf]
    %v411 = vld [vmem:[#allocation4 + $0xb0] sm:$0xf]
    %v412 = vld [vmem:[#allocation4 + $0xb4] sm:$0xf]
    %v413 = vld [vmem:[#allocation4 + $0xb8] sm:$0xf]
    %v414 = vld [vmem:[#allocation4 + $0xbc] sm:$0xf]
    %v415 = vld [vmem:[#allocation4 + $0xc0] sm:$0xf]
    %v416 = vld [vmem:[#allocation4 + $0xc4] sm:$0xf]
    %v417 = vld [vmem:[#allocation4 + $0xc8] sm:$0xf]
    %v418 = vld [vmem:[#allocation4 + $0xcc] sm:$0xf]
    %v419 = vld [vmem:[#allocation4 + $0xd0] sm:$0xf]
    %v420 = vld [vmem:[#allocation4 + $0xd4] sm:$0xf]
    %v421 = vld [vmem:[#allocation4 + $0xd8] sm:$0xf]
    %v422 = vld [vmem:[#allocation4 + $0xdc] sm:$0xf]
    %v423 = vld [vmem:[#allocation4 + $0xe0] sm:$0xf]
    %v424 = vld [vmem:[#allocation4 + $0xe4] sm:$0xf]
    %v425 = vld [vmem:[#allocation4 + $0xe8] sm:$0xf]
    %v426 = vld [vmem:[#allocation4 + $0xec] sm:$0xf]
    %v427 = vld [vmem:[#allocation4 + $0xf0] sm:$0xf]
    %v428 = vld [vmem:[#allocation4 + $0xf4] sm:$0xf]
    %v429 = vld [vmem:[#allocation4 + $0xf8] sm:$0xf]
    %v430 = vld [vmem:[#allocation4 + $0xfc] sm:$0xf]
    %v463 = vunpack.c.l.b16 %v399
    %v464 = vunpack.c.l.b16 %v400
    %v465 = vunpack.c.l.b16 %v401
    %v466 = vunpack.c.l.b16 %v402
    %v467 = vunpack.c.l.b16 %v403
    %v468 = vunpack.c.l.b16 %v404
    %v469 = vunpack.c.l.b16 %v405
    %v470 = vunpack.c.l.b16 %v406
    %v471 = vunpack.c.l.b16 %v407
    %v472 = vunpack.c.l.b16 %v408
    %v473 = vunpack.c.l.b16 %v409
    %v474 = vunpack.c.l.b16 %v410
    %v475 = vunpack.c.l.b16 %v411
    %v476 = vunpack.c.l.b16 %v412
    %v477 = vunpack.c.l.b16 %v413
    %v478 = vunpack.c.l.b16 %v414
    %v479 = vunpack.c.l.b16 %v415
    %v480 = vunpack.c.l.b16 %v416
    %v481 = vunpack.c.l.b16 %v417
    %v482 = vunpack.c.l.b16 %v418
    %v483 = vunpack.c.l.b16 %v419
    %v484 = vunpack.c.l.b16 %v420
    %v485 = vunpack.c.l.b16 %v421
    %v486 = vunpack.c.l.b16 %v422
    %v487 = vunpack.c.l.b16 %v423
    %v488 = vunpack.c.l.b16 %v424
    %v489 = vunpack.c.l.b16 %v425
    %v490 = vunpack.c.l.b16 %v426
    %v491 = vunpack.c.l.b16 %v427
    %v492 = vunpack.c.l.b16 %v428
    %v493 = vunpack.c.l.b16 %v429
    %v494 = vunpack.c.l.b16 %v430
    %v495 = vpack.c.b16 %v464, %v463
    %v496 = vpack.c.b16 %v466, %v465
    %v497 = vpack.c.b16 %v468, %v467
    %v498 = vpack.c.b16 %v470, %v469
    %v499 = vpack.c.b16 %v472, %v471
    %v500 = vpack.c.b16 %v474, %v473
    %v501 = vpack.c.b16 %v476, %v475
    %v502 = vpack.c.b16 %v478, %v477
    %v503 = vpack.c.b16 %v480, %v479
    %v504 = vpack.c.b16 %v482, %v481
    %v505 = vpack.c.b16 %v484, %v483
    %v506 = vpack.c.b16 %v486, %v485
    %v507 = vpack.c.b16 %v488, %v487
    %v508 = vpack.c.b16 %v490, %v489
    %v509 = vpack.c.b16 %v492, %v491
    %v510 = vpack.c.b16 %v494, %v493
    %527 = vmatpush.bf16.msra.mxu0 %v502
    %528 = vmatpush.bf16.msra.mxu0 %v501
    %529 = vmatpush.bf16.msra.mxu0 %v500
    %530 = vmatpush.bf16.msra.mxu0 %v499
    %531 = vmatpush.bf16.msra.mxu0 %v498
    %532 = vmatpush.bf16.msra.mxu0 %v497
    %533 = vmatpush.bf16.msra.mxu0 %v496
    %534 = vmatpush.bf16.msra.mxu0 %v495
    %535 = vmatmul.bf16.gmra.mxu0 %v397
    %v536 = vpop.f32.mrf.mxu0
    %v537 = vadd.f32 0.0, %v536
    %v538 = vpop.f32.mrf.mxu0
    %v539 = vadd.f32 0.0, %v538
    %540 = vdwg.mxu0
    %541 = vmatpush.bf16.msra.mxu0 %v510
    %542 = vmatpush.bf16.msra.mxu0 %v509
    %543 = vmatpush.bf16.msra.mxu0 %v508
    %544 = vmatpush.bf16.msra.mxu0 %v507
    %545 = vmatpush.bf16.msra.mxu0 %v506
    %546 = vmatpush.bf16.msra.mxu0 %v505
    %547 = vmatpush.bf16.msra.mxu0 %v504
    %548 = vmatpush.bf16.msra.mxu0 %v503
    %549 = vmatmul.bf16.gmra.mxu0 %v398
    %v550 = vpop.f32.mrf.mxu0
    %v551 = vadd.f32 %v537, %v550
    %v552 = vpop.f32.mrf.mxu0
    %v553 = vadd.f32 %v539, %v552
    %554 = vdwg.mxu0
    %v587 = vunpack.c.l.b16 %v365
    %v588 = vunpack.c.l.b16 %v366
    %v589 = vunpack.c.l.b16 %v367
    %v590 = vunpack.c.l.b16 %v368
    %v591 = vunpack.c.l.b16 %v369
    %v592 = vunpack.c.l.b16 %v370
    %v593 = vunpack.c.l.b16 %v371
    %v594 = vunpack.c.l.b16 %v372
    %v595 = vunpack.c.l.b16 %v373
    %v596 = vunpack.c.l.b16 %v374
    %v597 = vunpack.c.l.b16 %v375
    %v598 = vunpack.c.l.b16 %v376
    %v599 = vunpack.c.l.b16 %v377
    %v600 = vunpack.c.l.b16 %v378
    %v601 = vunpack.c.l.b16 %v379
    %v602 = vunpack.c.l.b16 %v380
    %v603 = vunpack.c.l.b16 %v381
    %v604 = vunpack.c.l.b16 %v382
    %v605 = vunpack.c.l.b16 %v383
    %v606 = vunpack.c.l.b16 %v384
    %v607 = vunpack.c.l.b16 %v385
    %v608 = vunpack.c.l.b16 %v386
    %v609 = vunpack.c.l.b16 %v387
    %v610 = vunpack.c.l.b16 %v388
    %v611 = vunpack.c.l.b16 %v389
    %v612 = vunpack.c.l.b16 %v390
    %v613 = vunpack.c.l.b16 %v391
    %v614 = vunpack.c.l.b16 %v392
    %v615 = vunpack.c.l.b16 %v393
    %v616 = vunpack.c.l.b16 %v394
    %v617 = vunpack.c.l.b16 %v395
    %v618 = vunpack.c.l.b16 %v396
    %v619 = vpack.c.b16 %v588, %v587
    %v620 = vpack.c.b16 %v590, %v589
    %v621 = vpack.c.b16 %v592, %v591
    %v622 = vpack.c.b16 %v594, %v593
    %v623 = vpack.c.b16 %v596, %v595
    %v624 = vpack.c.b16 %v598, %v597
    %v625 = vpack.c.b16 %v600, %v599
    %v626 = vpack.c.b16 %v602, %v601
    %v627 = vpack.c.b16 %v604, %v603
    %v628 = vpack.c.b16 %v606, %v605
    %v629 = vpack.c.b16 %v608, %v607
    %v630 = vpack.c.b16 %v610, %v609
    %v631 = vpack.c.b16 %v612, %v611
    %v632 = vpack.c.b16 %v614, %v613
    %v633 = vpack.c.b16 %v616, %v615
    %v634 = vpack.c.b16 %v618, %v617
    %651 = vmatpush.bf16.msra.mxu0 %v626
    %652 = vmatpush.bf16.msra.mxu0 %v625
    %653 = vmatpush.bf16.msra.mxu0 %v624
    %654 = vmatpush.bf16.msra.mxu0 %v623
    %655 = vmatpush.bf16.msra.mxu0 %v622
    %656 = vmatpush.bf16.msra.mxu0 %v621
    %657 = vmatpush.bf16.msra.mxu0 %v620
    %658 = vmatpush.bf16.msra.mxu0 %v619
    %659 = vmatmul.bf16.gmra.mxu0 %v363
    %v660 = vpop.f32.mrf.mxu0
    %v661 = vadd.f32 %v551, %v660
    %v662 = vpop.f32.mrf.mxu0
    %v663 = vadd.f32 %v553, %v662
    %664 = vdwg.mxu0
    %665 = vmatpush.bf16.msra.mxu0 %v634
    %666 = vmatpush.bf16.msra.mxu0 %v633
    %667 = vmatpush.bf16.msra.mxu0 %v632
    %668 = vmatpush.bf16.msra.mxu0 %v631
    %669 = vmatpush.bf16.msra.mxu0 %v630
    %670 = vmatpush.bf16.msra.mxu0 %v629
    %671 = vmatpush.bf16.msra.mxu0 %v628
    %672 = vmatpush.bf16.msra.mxu0 %v627
    %673 = vmatmul.bf16.gmra.mxu0 %v364
    %v674 = vpop.f32.mrf.mxu0
    %v675 = vadd.f32 %v661, %v674
    %v676 = vpop.f32.mrf.mxu0
    %v677 = vadd.f32 %v663, %v676
    %678 = vdwg.mxu0
    %v679 = vld [vmem:[#allocation4 + $0x100] sm:$0xf]
    %v680 = vld [vmem:[#allocation4 + $0x104] sm:$0xf]
    %v681 = vld [vmem:[#allocation4 + $0x108] sm:$0xf]
    %v682 = vld [vmem:[#allocation4 + $0x10c] sm:$0xf]
    %v683 = vld [vmem:[#allocation4 + $0x110] sm:$0xf]
    %v684 = vld [vmem:[#allocation4 + $0x114] sm:$0xf]
    %v685 = vld [vmem:[#allocation4 + $0x118] sm:$0xf]
    %v686 = vld [vmem:[#allocation4 + $0x11c] sm:$0xf]
    %v695 = vunpack.c.l.b16 %v679
    %v696 = vunpack.c.l.b16 %v680
    %v697 = vunpack.c.l.b16 %v681
    %v698 = vunpack.c.l.b16 %v682
    %v699 = vunpack.c.l.b16 %v683
    %v700 = vunpack.c.l.b16 %v684
    %v701 = vunpack.c.l.b16 %v685
    %v702 = vunpack.c.l.b16 %v686
    %v703 = vpack.c.b16 %v696, %v695
    %v704 = vpack.c.b16 %v698, %v697
    %v705 = vpack.c.b16 %v700, %v699
    %v706 = vpack.c.b16 %v702, %v701
    %711 = vmatpush.bf16.msra.mxu0 0
    %712 = vmatpush.bf16.msra.mxu0 0
    %713 = vmatpush.bf16.msra.mxu0 0
    %714 = vmatpush.bf16.msra.mxu0 0
    %715 = vmatpush.bf16.msra.mxu0 %v706
    %716 = vmatpush.bf16.msra.mxu0 %v705
    %717 = vmatpush.bf16.msra.mxu0 %v704
    %718 = vmatpush.bf16.msra.mxu0 %v703
    %719 = vmatmul.bf16.gmra.mxu0 %v118
    %v720 = vpop.f32.mrf.mxu0
    %v721 = vadd.f32 0.0, %v720
    %v722 = vpop.f32.mrf.mxu0
    %v723 = vadd.f32 0.0, %v722
    %724 = vdwg.mxu0
    %v725 = vadd.f32 %v675, %v721
    %v726 = vadd.f32 %v677, %v723
    %v727 = vperm.slane %v55, 0
    %v728 = vadd.f32 %v725, %v727
    %v729 = vadd.f32 %v726, %v727
    %vm730 = vcmp.ge.f32.partialorder %v728, 0.0
    %vm731 = vcmp.ge.f32.partialorder %v729, 0.0
    %v732 = vmul.f32 %v728, 0.01
    %v733 = vmul.f32 %v729, 0.01
    %v734 = vsel %vm730, %v728, %v732
    %v735 = vsel %vm731, %v729, %v733
    %v736 = vpack.c.bf16 %v735, %v734
    %v737 = vld [vmem:[#allocation4 + $0x120] sm:$0xf]
    %v738 = vld [vmem:[#allocation4 + $0x124] sm:$0xf]
    %v739 = vld [vmem:[#allocation4 + $0x128] sm:$0xf]
    %v740 = vld [vmem:[#allocation4 + $0x12c] sm:$0xf]
    %v741 = vld [vmem:[#allocation4 + $0x130] sm:$0xf]
    %v742 = vld [vmem:[#allocation4 + $0x134] sm:$0xf]
    %v743 = vld [vmem:[#allocation4 + $0x138] sm:$0xf]
    %v744 = vld [vmem:[#allocation4 + $0x13c] sm:$0xf]
    %v745 = vld [vmem:[#allocation4 + $0x140] sm:$0xf]
    %v746 = vld [vmem:[#allocation4 + $0x144] sm:$0xf]
    %v747 = vld [vmem:[#allocation4 + $0x148] sm:$0xf]
    %v748 = vld [vmem:[#allocation4 + $0x14c] sm:$0xf]
    %v749 = vld [vmem:[#allocation4 + $0x150] sm:$0xf]
    %v750 = vld [vmem:[#allocation4 + $0x154] sm:$0xf]
    %v751 = vld [vmem:[#allocation4 + $0x158] sm:$0xf]
    %v752 = vld [vmem:[#allocation4 + $0x15c] sm:$0xf]
    %v753 = vperm.slane %v55, 1
    %v770 = vunpack.c.l.b16 %v737
    %v771 = vunpack.c.l.b16 %v738
    %v772 = vunpack.c.l.b16 %v739
    %v773 = vunpack.c.l.b16 %v740
    %v774 = vunpack.c.l.b16 %v741
    %v775 = vunpack.c.l.b16 %v742
    %v776 = vunpack.c.l.b16 %v743
    %v777 = vunpack.c.l.b16 %v744
    %v778 = vunpack.c.l.b16 %v745
    %v779 = vunpack.c.l.b16 %v746
    %v780 = vunpack.c.l.b16 %v747
    %v781 = vunpack.c.l.b16 %v748
    %v782 = vunpack.c.l.b16 %v749
    %v783 = vunpack.c.l.b16 %v750
    %v784 = vunpack.c.l.b16 %v751
    %v785 = vunpack.c.l.b16 %v752
    %v786 = vpack.c.b16 %v771, %v770
    %v787 = vpack.c.b16 %v773, %v772
    %v788 = vpack.c.b16 %v775, %v774
    %v789 = vpack.c.b16 %v777, %v776
    %v790 = vpack.c.b16 %v779, %v778
    %v791 = vpack.c.b16 %v781, %v780
    %v792 = vpack.c.b16 %v783, %v782
    %v793 = vpack.c.b16 %v785, %v784
    %802 = vmatpush.bf16.msra.mxu0 %v793
    %803 = vmatpush.bf16.msra.mxu0 %v792
    %804 = vmatpush.bf16.msra.mxu0 %v791
    %805 = vmatpush.bf16.msra.mxu0 %v790
    %806 = vmatpush.bf16.msra.mxu0 %v789
    %807 = vmatpush.bf16.msra.mxu0 %v788
    %808 = vmatpush.bf16.msra.mxu0 %v787
    %809 = vmatpush.bf16.msra.mxu0 %v786
    %810 = vmatmul.bf16.gmra.mxu0 %v736
    %v811 = vpop.f32.mrf.mxu0
    %v812 = vadd.f32 %v753, %v811
    %v813 = vpop.f32.mrf.mxu0
    %v814 = vadd.f32 %v753, %v813
    %815 = vdwg.mxu0
    %vm816 = vcmp.ge.f32.partialorder %v812, 0.0
    %vm817 = vcmp.ge.f32.partialorder %v814, 0.0
    %v818 = vmul.f32 %v812, 0.01
    %v819 = vmul.f32 %v814, 0.01
    %v820 = vsel %vm816, %v812, %v818
    %v821 = vsel %vm817, %v814, %v819
    %v822 = vpack.c.bf16 %v821, %v820
    %v823 = vld [vmem:[#allocation4 + $0x160] sm:$0xf]
    %v824 = vld [vmem:[#allocation4 + $0x164] sm:$0xf]
    %v825 = vld [vmem:[#allocation4 + $0x168] sm:$0xf]
    %v826 = vld [vmem:[#allocation4 + $0x16c] sm:$0xf]
    %v827 = vld [vmem:[#allocation4 + $0x170] sm:$0xf]
    %v828 = vld [vmem:[#allocation4 + $0x174] sm:$0xf]
    %v829 = vld [vmem:[#allocation4 + $0x178] sm:$0xf]
    %v830 = vld [vmem:[#allocation4 + $0x17c] sm:$0xf]
    %v831 = vld [vmem:[#allocation4 + $0x180] sm:$0xf]
    %v832 = vld [vmem:[#allocation4 + $0x184] sm:$0xf]
    %v833 = vld [vmem:[#allocation4 + $0x188] sm:$0xf]
    %v834 = vld [vmem:[#allocation4 + $0x18c] sm:$0xf]
    %v835 = vld [vmem:[#allocation4 + $0x190] sm:$0xf]
    %v836 = vld [vmem:[#allocation4 + $0x194] sm:$0xf]
    %v837 = vld [vmem:[#allocation4 + $0x198] sm:$0xf]
    %v838 = vld [vmem:[#allocation4 + $0x19c] sm:$0xf]
    %v839 = vperm.slane %v55, 2
    %v856 = vunpack.c.l.b16 %v823
    %v857 = vunpack.c.l.b16 %v824
    %v858 = vunpack.c.l.b16 %v825
    %v859 = vunpack.c.l.b16 %v826
    %v860 = vunpack.c.l.b16 %v827
    %v861 = vunpack.c.l.b16 %v828
    %v862 = vunpack.c.l.b16 %v829
    %v863 = vunpack.c.l.b16 %v830
    %v864 = vunpack.c.l.b16 %v831
    %v865 = vunpack.c.l.b16 %v832
    %v866 = vunpack.c.l.b16 %v833
    %v867 = vunpack.c.l.b16 %v834
    %v868 = vunpack.c.l.b16 %v835
    %v869 = vunpack.c.l.b16 %v836
    %v870 = vunpack.c.l.b16 %v837
    %v871 = vunpack.c.l.b16 %v838
    %v872 = vpack.c.b16 %v857, %v856
    %v873 = vpack.c.b16 %v859, %v858
    %v874 = vpack.c.b16 %v861, %v860
    %v875 = vpack.c.b16 %v863, %v862
    %v876 = vpack.c.b16 %v865, %v864
    %v877 = vpack.c.b16 %v867, %v866
    %v878 = vpack.c.b16 %v869, %v868
    %v879 = vpack.c.b16 %v871, %v870
    %888 = vmatpush.bf16.msra.mxu0 %v879
    %889 = vmatpush.bf16.msra.mxu0 %v878
    %890 = vmatpush.bf16.msra.mxu0 %v877
    %891 = vmatpush.bf16.msra.mxu0 %v876
    %892 = vmatpush.bf16.msra.mxu0 %v875
    %893 = vmatpush.bf16.msra.mxu0 %v874
    %894 = vmatpush.bf16.msra.mxu0 %v873
    %895 = vmatpush.bf16.msra.mxu0 %v872
    %896 = vmatmul.bf16.gmra.mxu0 %v822
    %v897 = vpop.f32.mrf.mxu0
    %v898 = vadd.f32 %v839, %v897
    %v899 = vpop.f32.mrf.mxu0
    %v900 = vadd.f32 %v839, %v899
    %901 = vdwg.mxu0
    %vm902 = vcmp.ge.f32.partialorder %v898, 0.0
    %vm903 = vcmp.ge.f32.partialorder %v900, 0.0
    %v904 = vmul.f32 %v898, 0.01
    %v905 = vmul.f32 %v900, 0.01
    %v906 = vsel %vm902, %v898, %v904
    %v907 = vsel %vm903, %v900, %v905
    %v908 = vpack.c.bf16 %v907, %v906
    %v909 = vld [vmem:[#allocation4 + $0x1a0] sm:$0xf]
    %v910 = vld [vmem:[#allocation4 + $0x1a4] sm:$0xf]
    %v911 = vld [vmem:[#allocation4 + $0x1a8] sm:$0xf]
    %v912 = vld [vmem:[#allocation4 + $0x1ac] sm:$0xf]
    %v913 = vld [vmem:[#allocation4 + $0x1b0] sm:$0xf]
    %v914 = vld [vmem:[#allocation4 + $0x1b4] sm:$0xf]
    %v915 = vld [vmem:[#allocation4 + $0x1b8] sm:$0xf]
    %v916 = vld [vmem:[#allocation4 + $0x1bc] sm:$0xf]
    %v917 = vld [vmem:[#allocation4 + $0x1c0] sm:$0xf]
    %v918 = vld [vmem:[#allocation4 + $0x1c4] sm:$0xf]
    %v919 = vld [vmem:[#allocation4 + $0x1c8] sm:$0xf]
    %v920 = vld [vmem:[#allocation4 + $0x1cc] sm:$0xf]
    %v921 = vld [vmem:[#allocation4 + $0x1d0] sm:$0xf]
    %v922 = vld [vmem:[#allocation4 + $0x1d4] sm:$0xf]
    %v923 = vld [vmem:[#allocation4 + $0x1d8] sm:$0xf]
    %v924 = vld [vmem:[#allocation4 + $0x1dc] sm:$0xf]
    %v925 = vperm.slane %v55, 3
    %v942 = vunpack.c.l.b16 %v909
    %v943 = vunpack.c.l.b16 %v910
    %v944 = vunpack.c.l.b16 %v911
    %v945 = vunpack.c.l.b16 %v912
    %v946 = vunpack.c.l.b16 %v913
    %v947 = vunpack.c.l.b16 %v914
    %v948 = vunpack.c.l.b16 %v915
    %v949 = vunpack.c.l.b16 %v916
    %v950 = vunpack.c.l.b16 %v917
    %v951 = vunpack.c.l.b16 %v918
    %v952 = vunpack.c.l.b16 %v919
    %v953 = vunpack.c.l.b16 %v920
    %v954 = vunpack.c.l.b16 %v921
    %v955 = vunpack.c.l.b16 %v922
    %v956 = vunpack.c.l.b16 %v923
    %v957 = vunpack.c.l.b16 %v924
    %v958 = vpack.c.b16 %v943, %v942
    %v959 = vpack.c.b16 %v945, %v944
    %v960 = vpack.c.b16 %v947, %v946
    %v961 = vpack.c.b16 %v949, %v948
    %v962 = vpack.c.b16 %v951, %v950
    %v963 = vpack.c.b16 %v953, %v952
    %v964 = vpack.c.b16 %v955, %v954
    %v965 = vpack.c.b16 %v957, %v956
    %974 = vmatpush.bf16.msra.mxu0 %v965
    %975 = vmatpush.bf16.msra.mxu0 %v964
    %976 = vmatpush.bf16.msra.mxu0 %v963
    %977 = vmatpush.bf16.msra.mxu0 %v962
    %978 = vmatpush.bf16.msra.mxu0 %v961
    %979 = vmatpush.bf16.msra.mxu0 %v960
    %980 = vmatpush.bf16.msra.mxu0 %v959
    %981 = vmatpush.bf16.msra.mxu0 %v958
    %982 = vmatmul.bf16.gmra.mxu0 %v908
    %v983 = vpop.f32.mrf.mxu0
    %v984 = vadd.f32 %v925, %v983
    %v985 = vpop.f32.mrf.mxu0
    %v986 = vadd.f32 %v925, %v985
    %987 = vdwg.mxu0
    %vm988 = vcmp.ge.f32.partialorder %v984, 0.0
    %vm989 = vcmp.ge.f32.partialorder %v986, 0.0
    %v990 = vmul.f32 %v984, 0.01
    %v991 = vmul.f32 %v986, 0.01
    %v992 = vsel %vm988, %v984, %v990
    %v993 = vsel %vm989, %v986, %v991
    %v994 = vpack.c.bf16 %v993, %v992
    %v995 = vld [vmem:[#allocation4 + $0x1e0] sm:$0xf]
    %v996 = vld [vmem:[#allocation4 + $0x1e4] sm:$0xf]
    %v997 = vld [vmem:[#allocation4 + $0x1e8] sm:$0xf]
    %v998 = vld [vmem:[#allocation4 + $0x1ec] sm:$0xf]
    %v999 = vld [vmem:[#allocation4 + $0x1f0] sm:$0xf]
    %v1000 = vld [vmem:[#allocation4 + $0x1f4] sm:$0xf]
    %v1001 = vld [vmem:[#allocation4 + $0x1f8] sm:$0xf]
    %v1002 = vld [vmem:[#allocation4 + $0x1fc] sm:$0xf]
    %v1003 = vld [vmem:[#allocation4 + $0x200] sm:$0xf]
    %v1004 = vld [vmem:[#allocation4 + $0x204] sm:$0xf]
    %v1005 = vld [vmem:[#allocation4 + $0x208] sm:$0xf]
    %v1006 = vld [vmem:[#allocation4 + $0x20c] sm:$0xf]
    %v1007 = vld [vmem:[#allocation4 + $0x210] sm:$0xf]
    %v1008 = vld [vmem:[#allocation4 + $0x214] sm:$0xf]
    %v1009 = vld [vmem:[#allocation4 + $0x218] sm:$0xf]
    %v1010 = vld [vmem:[#allocation4 + $0x21c] sm:$0xf]
    %v1011 = vperm.slane %v55, 4
    %v1028 = vunpack.c.l.b16 %v995
    %v1029 = vunpack.c.l.b16 %v996
    %v1030 = vunpack.c.l.b16 %v997
    %v1031 = vunpack.c.l.b16 %v998
    %v1032 = vunpack.c.l.b16 %v999
    %v1033 = vunpack.c.l.b16 %v1000
    %v1034 = vunpack.c.l.b16 %v1001
    %v1035 = vunpack.c.l.b16 %v1002
    %v1036 = vunpack.c.l.b16 %v1003
    %v1037 = vunpack.c.l.b16 %v1004
    %v1038 = vunpack.c.l.b16 %v1005
    %v1039 = vunpack.c.l.b16 %v1006
    %v1040 = vunpack.c.l.b16 %v1007
    %v1041 = vunpack.c.l.b16 %v1008
    %v1042 = vunpack.c.l.b16 %v1009
    %v1043 = vunpack.c.l.b16 %v1010
    %v1044 = vpack.c.b16 %v1029, %v1028
    %v1045 = vpack.c.b16 %v1031, %v1030
    %v1046 = vpack.c.b16 %v1033, %v1032
    %v1047 = vpack.c.b16 %v1035, %v1034
    %v1048 = vpack.c.b16 %v1037, %v1036
    %v1049 = vpack.c.b16 %v1039, %v1038
    %v1050 = vpack.c.b16 %v1041, %v1040
    %v1051 = vpack.c.b16 %v1043, %v1042
    %1060 = vmatpush.bf16.msra.mxu0 %v1051
    %1061 = vmatpush.bf16.msra.mxu0 %v1050
    %1062 = vmatpush.bf16.msra.mxu0 %v1049
    %1063 = vmatpush.bf16.msra.mxu0 %v1048
    %1064 = vmatpush.bf16.msra.mxu0 %v1047
    %1065 = vmatpush.bf16.msra.mxu0 %v1046
    %1066 = vmatpush.bf16.msra.mxu0 %v1045
    %1067 = vmatpush.bf16.msra.mxu0 %v1044
    %1068 = vmatmul.bf16.gmra.mxu0 %v994
    %v1069 = vpop.f32.mrf.mxu0
    %v1070 = vadd.f32 %v1011, %v1069
    %v1071 = vpop.f32.mrf.mxu0
    %v1072 = vadd.f32 %v1011, %v1071
    %1073 = vdwg.mxu0
    %vm1074 = vcmp.ge.f32.partialorder %v1070, 0.0
    %vm1075 = vcmp.ge.f32.partialorder %v1072, 0.0
    %v1076 = vmul.f32 %v1070, 0.01
    %v1077 = vmul.f32 %v1072, 0.01
    %v1078 = vsel %vm1074, %v1070, %v1076
    %v1079 = vsel %vm1075, %v1072, %v1077
    %v1080 = vpack.c.bf16 %v1079, %v1078
    %v1081 = vld [vmem:[#allocation4 + $0x220] sm:$0xf]
    %v1082 = vld [vmem:[#allocation4 + $0x224] sm:$0xf]
    %v1083 = vld [vmem:[#allocation4 + $0x228] sm:$0xf]
    %v1084 = vld [vmem:[#allocation4 + $0x22c] sm:$0xf]
    %v1085 = vld [vmem:[#allocation4 + $0x230] sm:$0xf]
    %v1086 = vld [vmem:[#allocation4 + $0x234] sm:$0xf]
    %v1087 = vld [vmem:[#allocation4 + $0x238] sm:$0xf]
    %v1088 = vld [vmem:[#allocation4 + $0x23c] sm:$0xf]
    %v1089 = vld [vmem:[#allocation4 + $0x240] sm:$0xf]
    %v1090 = vld [vmem:[#allocation4 + $0x244] sm:$0xf]
    %v1091 = vld [vmem:[#allocation4 + $0x248] sm:$0xf]
    %v1092 = vld [vmem:[#allocation4 + $0x24c] sm:$0xf]
    %v1093 = vld [vmem:[#allocation4 + $0x250] sm:$0xf]
    %v1094 = vld [vmem:[#allocation4 + $0x254] sm:$0xf]
    %v1095 = vld [vmem:[#allocation4 + $0x258] sm:$0xf]
    %v1096 = vld [vmem:[#allocation4 + $0x25c] sm:$0xf]
    %v1097 = vperm.slane %v55, 5
    %v1114 = vunpack.c.l.b16 %v1081
    %v1115 = vunpack.c.l.b16 %v1082
    %v1116 = vunpack.c.l.b16 %v1083
    %v1117 = vunpack.c.l.b16 %v1084
    %v1118 = vunpack.c.l.b16 %v1085
    %v1119 = vunpack.c.l.b16 %v1086
    %v1120 = vunpack.c.l.b16 %v1087
    %v1121 = vunpack.c.l.b16 %v1088
    %v1122 = vunpack.c.l.b16 %v1089
    %v1123 = vunpack.c.l.b16 %v1090
    %v1124 = vunpack.c.l.b16 %v1091
    %v1125 = vunpack.c.l.b16 %v1092
    %v1126 = vunpack.c.l.b16 %v1093
    %v1127 = vunpack.c.l.b16 %v1094
    %v1128 = vunpack.c.l.b16 %v1095
    %v1129 = vunpack.c.l.b16 %v1096
    %v1130 = vpack.c.b16 %v1115, %v1114
    %v1131 = vpack.c.b16 %v1117, %v1116
    %v1132 = vpack.c.b16 %v1119, %v1118
    %v1133 = vpack.c.b16 %v1121, %v1120
    %v1134 = vpack.c.b16 %v1123, %v1122
    %v1135 = vpack.c.b16 %v1125, %v1124
    %v1136 = vpack.c.b16 %v1127, %v1126
    %v1137 = vpack.c.b16 %v1129, %v1128
    %1146 = vmatpush.bf16.msra.mxu0 %v1137
    %1147 = vmatpush.bf16.msra.mxu0 %v1136
    %1148 = vmatpush.bf16.msra.mxu0 %v1135
    %1149 = vmatpush.bf16.msra.mxu0 %v1134
    %1150 = vmatpush.bf16.msra.mxu0 %v1133
    %1151 = vmatpush.bf16.msra.mxu0 %v1132
    %1152 = vmatpush.bf16.msra.mxu0 %v1131
    %1153 = vmatpush.bf16.msra.mxu0 %v1130
    %1154 = vmatmul.bf16.gmra.mxu0 %v1080
    %v1155 = vpop.f32.mrf.mxu0
    %v1156 = vadd.f32 %v1097, %v1155
    %v1157 = vpop.f32.mrf.mxu0
    %v1158 = vadd.f32 %v1097, %v1157
    %1159 = vdwg.mxu0
    %vm1160 = vcmp.ge.f32.partialorder %v1156, 0.0
    %vm1161 = vcmp.ge.f32.partialorder %v1158, 0.0
    %v1162 = vmul.f32 %v1156, 0.01
    %v1163 = vmul.f32 %v1158, 0.01
    %v1164 = vsel %vm1160, %v1156, %v1162
    %v1165 = vsel %vm1161, %v1158, %v1163
    %v1166 = vpack.c.bf16 %v1165, %v1164
    %v1167 = vld [vmem:[#allocation4 + $0x260] sm:$0xf]
    %v1168 = vld [vmem:[#allocation4 + $0x264] sm:$0xf]
    %v1169 = vld [vmem:[#allocation4 + $0x268] sm:$0xf]
    %v1170 = vld [vmem:[#allocation4 + $0x26c] sm:$0xf]
    %v1171 = vld [vmem:[#allocation4 + $0x270] sm:$0xf]
    %v1172 = vld [vmem:[#allocation4 + $0x274] sm:$0xf]
    %v1173 = vld [vmem:[#allocation4 + $0x278] sm:$0xf]
    %v1174 = vld [vmem:[#allocation4 + $0x27c] sm:$0xf]
    %v1175 = vld [vmem:[#allocation4 + $0x280] sm:$0xf]
    %v1176 = vld [vmem:[#allocation4 + $0x284] sm:$0xf]
    %v1177 = vld [vmem:[#allocation4 + $0x288] sm:$0xf]
    %v1178 = vld [vmem:[#allocation4 + $0x28c] sm:$0xf]
    %v1179 = vld [vmem:[#allocation4 + $0x290] sm:$0xf]
    %v1180 = vld [vmem:[#allocation4 + $0x294] sm:$0xf]
    %v1181 = vld [vmem:[#allocation4 + $0x298] sm:$0xf]
    %v1182 = vld [vmem:[#allocation4 + $0x29c] sm:$0xf]
    %v1183 = vperm.slane %v55, 6
    %v1200 = vunpack.c.l.b16 %v1167
    %v1201 = vunpack.c.l.b16 %v1168
    %v1202 = vunpack.c.l.b16 %v1169
    %v1203 = vunpack.c.l.b16 %v1170
    %v1204 = vunpack.c.l.b16 %v1171
    %v1205 = vunpack.c.l.b16 %v1172
    %v1206 = vunpack.c.l.b16 %v1173
    %v1207 = vunpack.c.l.b16 %v1174
    %v1208 = vunpack.c.l.b16 %v1175
    %v1209 = vunpack.c.l.b16 %v1176
    %v1210 = vunpack.c.l.b16 %v1177
    %v1211 = vunpack.c.l.b16 %v1178
    %v1212 = vunpack.c.l.b16 %v1179
    %v1213 = vunpack.c.l.b16 %v1180
    %v1214 = vunpack.c.l.b16 %v1181
    %v1215 = vunpack.c.l.b16 %v1182
    %v1216 = vpack.c.b16 %v1201, %v1200
    %v1217 = vpack.c.b16 %v1203, %v1202
    %v1218 = vpack.c.b16 %v1205, %v1204
    %v1219 = vpack.c.b16 %v1207, %v1206
    %v1220 = vpack.c.b16 %v1209, %v1208
    %v1221 = vpack.c.b16 %v1211, %v1210
    %v1222 = vpack.c.b16 %v1213, %v1212
    %v1223 = vpack.c.b16 %v1215, %v1214
    %1232 = vmatpush.bf16.msra.mxu0 %v1223
    %1233 = vmatpush.bf16.msra.mxu0 %v1222
    %1234 = vmatpush.bf16.msra.mxu0 %v1221
    %1235 = vmatpush.bf16.msra.mxu0 %v1220
    %1236 = vmatpush.bf16.msra.mxu0 %v1219
    %1237 = vmatpush.bf16.msra.mxu0 %v1218
    %1238 = vmatpush.bf16.msra.mxu0 %v1217
    %1239 = vmatpush.bf16.msra.mxu0 %v1216
    %1240 = vmatmul.bf16.gmra.mxu0 %v1166
    %v1241 = vpop.f32.mrf.mxu0
    %v1242 = vadd.f32 %v1183, %v1241
    %v1243 = vpop.f32.mrf.mxu0
    %v1244 = vadd.f32 %v1183, %v1243
    %1245 = vdwg.mxu0
    %vm1246 = vcmp.ge.f32.partialorder %v1242, 0.0
    %vm1247 = vcmp.ge.f32.partialorder %v1244, 0.0
    %v1248 = vmul.f32 %v1242, 0.01
    %v1249 = vmul.f32 %v1244, 0.01
    %v1250 = vsel %vm1246, %v1242, %v1248
    %v1251 = vsel %vm1247, %v1244, %v1249
    %v1252 = vpack.c.bf16 %v1251, %v1250
    %v1253 = vld [vmem:[#allocation4 + $0x2a0] sm:$0xf]
    %v1254 = vld [vmem:[#allocation4 + $0x2a4] sm:$0xf]
    %v1255 = vld [vmem:[#allocation4 + $0x2a8] sm:$0xf]
    %v1256 = vld [vmem:[#allocation4 + $0x2ac] sm:$0xf]
    %v1257 = vld [vmem:[#allocation4 + $0x2b0] sm:$0xf]
    %v1258 = vld [vmem:[#allocation4 + $0x2b4] sm:$0xf]
    %v1259 = vld [vmem:[#allocation4 + $0x2b8] sm:$0xf]
    %v1260 = vld [vmem:[#allocation4 + $0x2bc] sm:$0xf]
    %v1261 = vld [vmem:[#allocation4 + $0x2c0] sm:$0xf]
    %v1262 = vld [vmem:[#allocation4 + $0x2c4] sm:$0xf]
    %v1263 = vld [vmem:[#allocation4 + $0x2c8] sm:$0xf]
    %v1264 = vld [vmem:[#allocation4 + $0x2cc] sm:$0xf]
    %v1265 = vld [vmem:[#allocation4 + $0x2d0] sm:$0xf]
    %v1266 = vld [vmem:[#allocation4 + $0x2d4] sm:$0xf]
    %v1267 = vld [vmem:[#allocation4 + $0x2d8] sm:$0xf]
    %v1268 = vld [vmem:[#allocation4 + $0x2dc] sm:$0xf]
    %v1269 = vperm.slane %v55, 7
    %v1286 = vunpack.c.l.b16 %v1253
    %v1287 = vunpack.c.l.b16 %v1254
    %v1288 = vunpack.c.l.b16 %v1255
    %v1289 = vunpack.c.l.b16 %v1256
    %v1290 = vunpack.c.l.b16 %v1257
    %v1291 = vunpack.c.l.b16 %v1258
    %v1292 = vunpack.c.l.b16 %v1259
    %v1293 = vunpack.c.l.b16 %v1260
    %v1294 = vunpack.c.l.b16 %v1261
    %v1295 = vunpack.c.l.b16 %v1262
    %v1296 = vunpack.c.l.b16 %v1263
    %v1297 = vunpack.c.l.b16 %v1264
    %v1298 = vunpack.c.l.b16 %v1265
    %v1299 = vunpack.c.l.b16 %v1266
    %v1300 = vunpack.c.l.b16 %v1267
    %v1301 = vunpack.c.l.b16 %v1268
    %v1302 = vpack.c.b16 %v1287, %v1286
    %v1303 = vpack.c.b16 %v1289, %v1288
    %v1304 = vpack.c.b16 %v1291, %v1290
    %v1305 = vpack.c.b16 %v1293, %v1292
    %v1306 = vpack.c.b16 %v1295, %v1294
    %v1307 = vpack.c.b16 %v1297, %v1296
    %v1308 = vpack.c.b16 %v1299, %v1298
    %v1309 = vpack.c.b16 %v1301, %v1300
    %1318 = vmatpush.bf16.msra.mxu0 %v1309
    %1319 = vmatpush.bf16.msra.mxu0 %v1308
    %1320 = vmatpush.bf16.msra.mxu0 %v1307
    %1321 = vmatpush.bf16.msra.mxu0 %v1306
    %1322 = vmatpush.bf16.msra.mxu0 %v1305
    %1323 = vmatpush.bf16.msra.mxu0 %v1304
    %1324 = vmatpush.bf16.msra.mxu0 %v1303
    %1325 = vmatpush.bf16.msra.mxu0 %v1302
    %1326 = vmatmul.bf16.gmra.mxu0 %v1252
    %v1327 = vpop.f32.mrf.mxu0
    %v1328 = vadd.f32 %v1269, %v1327
    %v1329 = vpop.f32.mrf.mxu0
    %v1330 = vadd.f32 %v1269, %v1329
    %1331 = vdwg.mxu0
    %vm1332 = vcmp.ge.f32.partialorder %v1328, 0.0
    %vm1333 = vcmp.ge.f32.partialorder %v1330, 0.0
    %v1334 = vmul.f32 %v1328, 0.01
    %v1335 = vmul.f32 %v1330, 0.01
    %v1336 = vsel %vm1332, %v1328, %v1334
    %v1337 = vsel %vm1333, %v1330, %v1335
    %v1338 = vpack.c.bf16 %v1337, %v1336
    %v1339 = vld [vmem:[#allocation4 + $0x2e0] sm:$0xf]
    %v1340 = vld [vmem:[#allocation4 + $0x2e4] sm:$0xf]
    %v1341 = vld [vmem:[#allocation4 + $0x2e8] sm:$0xf]
    %v1342 = vld [vmem:[#allocation4 + $0x2ec] sm:$0xf]
    %v1343 = vld [vmem:[#allocation4 + $0x2f0] sm:$0xf]
    %v1344 = vld [vmem:[#allocation4 + $0x2f4] sm:$0xf]
    %v1345 = vld [vmem:[#allocation4 + $0x2f8] sm:$0xf]
    %v1346 = vld [vmem:[#allocation4 + $0x2fc] sm:$0xf]
    %v1347 = vld [vmem:[#allocation4 + $0x300] sm:$0xf]
    %v1348 = vld [vmem:[#allocation4 + $0x304] sm:$0xf]
    %v1349 = vld [vmem:[#allocation4 + $0x308] sm:$0xf]
    %v1350 = vld [vmem:[#allocation4 + $0x30c] sm:$0xf]
    %v1351 = vld [vmem:[#allocation4 + $0x310] sm:$0xf]
    %v1352 = vld [vmem:[#allocation4 + $0x314] sm:$0xf]
    %v1353 = vld [vmem:[#allocation4 + $0x318] sm:$0xf]
    %v1354 = vld [vmem:[#allocation4 + $0x31c] sm:$0xf]
    %v1355 = vperm.slane %v56, 0
    %v1372 = vunpack.c.l.b16 %v1339
    %v1373 = vunpack.c.l.b16 %v1340
    %v1374 = vunpack.c.l.b16 %v1341
    %v1375 = vunpack.c.l.b16 %v1342
    %v1376 = vunpack.c.l.b16 %v1343
    %v1377 = vunpack.c.l.b16 %v1344
    %v1378 = vunpack.c.l.b16 %v1345
    %v1379 = vunpack.c.l.b16 %v1346
    %v1380 = vunpack.c.l.b16 %v1347
    %v1381 = vunpack.c.l.b16 %v1348
    %v1382 = vunpack.c.l.b16 %v1349
    %v1383 = vunpack.c.l.b16 %v1350
    %v1384 = vunpack.c.l.b16 %v1351
    %v1385 = vunpack.c.l.b16 %v1352
    %v1386 = vunpack.c.l.b16 %v1353
    %v1387 = vunpack.c.l.b16 %v1354
    %v1388 = vpack.c.b16 %v1373, %v1372
    %v1389 = vpack.c.b16 %v1375, %v1374
    %v1390 = vpack.c.b16 %v1377, %v1376
    %v1391 = vpack.c.b16 %v1379, %v1378
    %v1392 = vpack.c.b16 %v1381, %v1380
    %v1393 = vpack.c.b16 %v1383, %v1382
    %v1394 = vpack.c.b16 %v1385, %v1384
    %v1395 = vpack.c.b16 %v1387, %v1386
    %1404 = vmatpush.bf16.msra.mxu0 %v1395
    %1405 = vmatpush.bf16.msra.mxu0 %v1394
    %1406 = vmatpush.bf16.msra.mxu0 %v1393
    %1407 = vmatpush.bf16.msra.mxu0 %v1392
    %1408 = vmatpush.bf16.msra.mxu0 %v1391
    %1409 = vmatpush.bf16.msra.mxu0 %v1390
    %1410 = vmatpush.bf16.msra.mxu0 %v1389
    %1411 = vmatpush.bf16.msra.mxu0 %v1388
    %1412 = vmatmul.bf16.gmra.mxu0 %v1338
    %v1413 = vpop.f32.mrf.mxu0
    %v1414 = vadd.f32 %v1355, %v1413
    %v1415 = vpop.f32.mrf.mxu0
    %v1416 = vadd.f32 %v1355, %v1415
    %1417 = vdwg.mxu0
    %vm1418 = vcmp.ge.f32.partialorder %v1414, 0.0
    %vm1419 = vcmp.ge.f32.partialorder %v1416, 0.0
    %v1420 = vmul.f32 %v1414, 0.01
    %v1421 = vmul.f32 %v1416, 0.01
    %v1422 = vsel %vm1418, %v1414, %v1420
    %v1423 = vsel %vm1419, %v1416, %v1421
    %v1424 = vpack.c.bf16 %v1423, %v1422
    %v1425 = vld [vmem:[#allocation4 + $0x320] sm:$0xf]
    %v1426 = vld [vmem:[#allocation4 + $0x324] sm:$0xf]
    %v1427 = vld [vmem:[#allocation4 + $0x328] sm:$0xf]
    %v1428 = vld [vmem:[#allocation4 + $0x32c] sm:$0xf]
    %v1429 = vld [vmem:[#allocation4 + $0x330] sm:$0xf]
    %v1430 = vld [vmem:[#allocation4 + $0x334] sm:$0xf]
    %v1431 = vld [vmem:[#allocation4 + $0x338] sm:$0xf]
    %v1432 = vld [vmem:[#allocation4 + $0x33c] sm:$0xf]
    %v1433 = vld [vmem:[#allocation4 + $0x340] sm:$0xf]
    %v1434 = vld [vmem:[#allocation4 + $0x344] sm:$0xf]
    %v1435 = vld [vmem:[#allocation4 + $0x348] sm:$0xf]
    %v1436 = vld [vmem:[#allocation4 + $0x34c] sm:$0xf]
    %v1437 = vld [vmem:[#allocation4 + $0x350] sm:$0xf]
    %v1438 = vld [vmem:[#allocation4 + $0x354] sm:$0xf]
    %v1439 = vld [vmem:[#allocation4 + $0x358] sm:$0xf]
    %v1440 = vld [vmem:[#allocation4 + $0x35c] sm:$0xf]
    %v1441 = vperm.slane %v56, 1
    %v1458 = vunpack.c.l.b16 %v1425
    %v1459 = vunpack.c.l.b16 %v1426
    %v1460 = vunpack.c.l.b16 %v1427
    %v1461 = vunpack.c.l.b16 %v1428
    %v1462 = vunpack.c.l.b16 %v1429
    %v1463 = vunpack.c.l.b16 %v1430
    %v1464 = vunpack.c.l.b16 %v1431
    %v1465 = vunpack.c.l.b16 %v1432
    %v1466 = vunpack.c.l.b16 %v1433
    %v1467 = vunpack.c.l.b16 %v1434
    %v1468 = vunpack.c.l.b16 %v1435
    %v1469 = vunpack.c.l.b16 %v1436
    %v1470 = vunpack.c.l.b16 %v1437
    %v1471 = vunpack.c.l.b16 %v1438
    %v1472 = vunpack.c.l.b16 %v1439
    %v1473 = vunpack.c.l.b16 %v1440
    %v1474 = vpack.c.b16 %v1459, %v1458
    %v1475 = vpack.c.b16 %v1461, %v1460
    %v1476 = vpack.c.b16 %v1463, %v1462
    %v1477 = vpack.c.b16 %v1465, %v1464
    %v1478 = vpack.c.b16 %v1467, %v1466
    %v1479 = vpack.c.b16 %v1469, %v1468
    %v1480 = vpack.c.b16 %v1471, %v1470
    %v1481 = vpack.c.b16 %v1473, %v1472
    %1490 = vmatpush.bf16.msra.mxu0 %v1481
    %1491 = vmatpush.bf16.msra.mxu0 %v1480
    %1492 = vmatpush.bf16.msra.mxu0 %v1479
    %1493 = vmatpush.bf16.msra.mxu0 %v1478
    %1494 = vmatpush.bf16.msra.mxu0 %v1477
    %1495 = vmatpush.bf16.msra.mxu0 %v1476
    %1496 = vmatpush.bf16.msra.mxu0 %v1475
    %1497 = vmatpush.bf16.msra.mxu0 %v1474
    %1498 = vmatmul.bf16.gmra.mxu0 %v1424
    %v1499 = vpop.f32.mrf.mxu0
    %v1500 = vadd.f32 %v1441, %v1499
    %v1501 = vpop.f32.mrf.mxu0
    %v1502 = vadd.f32 %v1441, %v1501
    %1503 = vdwg.mxu0
    %vm1504 = vcmp.ge.f32.partialorder %v1500, 0.0
    %vm1505 = vcmp.ge.f32.partialorder %v1502, 0.0
    %v1506 = vmul.f32 %v1500, 0.01
    %v1507 = vmul.f32 %v1502, 0.01
    %v1508 = vsel %vm1504, %v1500, %v1506
    %v1509 = vsel %vm1505, %v1502, %v1507
    %v1510 = vpack.c.bf16 %v1508, %v1508
    %v1511 = vpack.c.bf16 %v1509, %v1509
    %1512 = vst [vmem:[%s4] sm:$0xf] %v1510
    %1513 = vst [vmem:[%s4 + $0x4] sm:$0xf] %v1511
    // Predicated region
    $region26: #{net_forward.1} parent=1 // pred_check
      _
    $region27: #{net_forward.1} parent=1 // pred_check_branch
      %1515 = sbr.rel (0) target = $region29
    $region28: #{net_forward.1} parent=1 // pred_region
      _
    $region29: #{net_forward.1} parent=1 // pred_fallthru
      _
    // Predicated region
    $region30: #{net_forward.1} parent=1 // pred_check
      _
    $region31: #{net_forward.1} parent=1 // pred_check_branch
      %1517 = sbr.rel (0) target = $region33
    $region32: #{net_forward.1} parent=1 // pred_region
      _
    $region33: #{net_forward.1} parent=1 // pred_fallthru
      _
    %1518 = vsyncpa [#allocation3], 1
    %1519 = vsyncpa [#allocation5], 1

</llo_original>
